<compile_context>
chip_gen: v7x
topology: tpu7x:2x2x1
jax: 0.10.0
libtpu: 0.0.40
codegen_flags: <defaults>
</compile_context>

<pallas_src>
import functools

import jax
import jax.numpy as jnp
from jax import lax
from jax.experimental import pallas as pl
from jax.experimental.pallas import tpu as pltpu


def _lstm_dir_kernel(gx_ref, whh_ref, out_ref, hN_ref, cN_ref, h_sc, c_sc, *,
                     chunk, hidden_dim, unroll):
    """One LSTM direction, one time-chunk per grid step.

    Grid = (2 directions ["parallel"], T // chunk ["arbitrary", sequential]).

    gx_ref : (chunk, Bp, 4H) bf16  precomputed x @ W_ih + b for this
                                   direction/chunk, gate layout [i|f|o|g];
                                   the backward direction's gx is already
                                   time-reversed, so in-chunk step s is
                                   recurrence step (chunk_idx*chunk + s).
    whh_ref: (H, 4H) bf16          recurrent weights for this direction.
    out_ref: (chunk, Bp, H) f32    h for every step of the chunk (step order).
    hN/cN  : (Bp, H) f32           final hidden / cell state (written once).
    h_sc/c_sc: (Bp, H) f32 VMEM    recurrence carry across chunks.
    """
    H = hidden_dim
    t = pl.program_id(1)

    @pl.when(t == 0)
    def _():
        h_sc[...] = jnp.zeros_like(h_sc)
        c_sc[...] = jnp.zeros_like(c_sc)

    whh = whh_ref[...]                         # (H, 4H), VMEM/vreg resident

    def step(s, carry):
        h = h_sc[...]
        c = c_sc[...]
        gates = gx_ref[s].astype(jnp.float32) + jnp.dot(
            h.astype(jnp.bfloat16), whh, preferred_element_type=jnp.float32)
        sig = jax.nn.sigmoid(gates[:, :3 * H])       # one wide sigmoid (Bp,3H)
        i_g = sig[:, 0:H]
        f_g = sig[:, H:2 * H]
        o_g = sig[:, 2 * H:3 * H]
        g_g = jnp.tanh(gates[:, 3 * H:4 * H])        # one tanh (Bp, H)
        c_new = f_g * c + i_g * g_g
        h_new = o_g * jnp.tanh(c_new)
        out_ref[s] = h_new                           # single contiguous store
        h_sc[...] = h_new
        c_sc[...] = c_new
        return carry

    lax.fori_loop(0, chunk, step, 0, unroll=unroll)

    @pl.when(t == pl.num_programs(1) - 1)
    def _():
        hN_ref[...] = h_sc[...]
        cN_ref[...] = c_sc[...]


def _reorder_ifog(w):
    """Permute gate blocks from PyTorch's [i|f|g|o] to [i|f|o|g] (last axis)."""
    i, f, g, o = jnp.split(w, 4, axis=-1)
    return jnp.concatenate([i, f, o, g], axis=-1)


def _pick_chunk(T, bytes_per_step, budget_bytes):
    """Largest divisor of T whose chunk (gx + out) fits the VMEM budget."""
    best = 1
    for tt in range(1, T + 1):
        if T % tt == 0 and tt * bytes_per_step <= budget_bytes:
            best = tt
    return best


def encoder_forward(tokens, params, hidden_dim,
                    chunk_budget_bytes=6 * 1024 * 1024):
    """tokens: (B, T) int32.

    Returns (outputs (B, T, 2H), hidden (1, B, 2H), cell (1, B, 2H)),
    matching PyTorch's batch_first bidirectional nn.LSTM + the cat/unsqueeze
    done in Encoder.forward.
    """
    H = hidden_dim
    B, T = tokens.shape

    # ---------------- glue (plain XLA): gather + fused input projection -----
    emb = params["embedding"][tokens].astype(jnp.float32)          # (B, T, E)
    E = emb.shape[-1]

    # one (T*B, E) @ (E, 8H) matmul; columns are [dir0 i f o g | dir1 i f o g]
    w_all = jnp.concatenate(
        [_reorder_ifog(params["w_ih_f"]), _reorder_ifog(params["w_ih_b"])],
        axis=-1)                                                    # (E, 8H)
    b_all = jnp.concatenate(
        [_reorder_ifog(params["b_f"])[0], _reorder_ifog(params["b_b"])[0]],
        axis=-1)                                                    # (8H,)

    gx = (emb.reshape(B * T, E) @ w_all + b_all).reshape(B, T, 2, 4 * H)
    gx = jnp.transpose(gx, (2, 1, 0, 3))                            # (2,T,B,4H)
    # backward direction consumes time in reverse -> pre-reverse its gx stream
    gx = jnp.concatenate([gx[0:1], gx[1:2, ::-1]], axis=0)
    gx = gx.astype(jnp.bfloat16)

    # pad batch to a multiple of 16 (bf16 sublane packing); extra rows are 0
    # and stay h = c = 0 through the recurrence, then get sliced off.
    Bp = max(16, -(-B // 16) * 16)
    if Bp != B:
        gx = jnp.pad(gx, ((0, 0), (0, 0), (0, Bp - B), (0, 0)))

    whh = jnp.stack([_reorder_ifog(params["w_hh_f"]),
                     _reorder_ifog(params["w_hh_b"])],
                    axis=0).astype(jnp.bfloat16)                    # (2, H, 4H)

    # time-chunk size: gx chunk (bf16) + out chunk (f32) under the VMEM budget
    bytes_per_step = Bp * 4 * H * 2 + Bp * H * 4
    Tt = _pick_chunk(T, bytes_per_step, chunk_budget_bytes)
    nc = T // Tt
    unroll = min(Tt, 8)

    # ---------------- Pallas kernel: the sequential recurrence --------------
    kernel = functools.partial(_lstm_dir_kernel, chunk=Tt, hidden_dim=H,
                               unroll=unroll)
    out, hN, cN = pl.pallas_call(
        kernel,
        out_shape=(
            jax.ShapeDtypeStruct((2, T, Bp, H), jnp.float32),
            jax.ShapeDtypeStruct((2, Bp, H), jnp.float32),
            jax.ShapeDtypeStruct((2, Bp, H), jnp.float32),
        ),
        grid_spec=pltpu.PrefetchScalarGridSpec(
            num_scalar_prefetch=0,
            grid=(2, nc),                    # (direction, time chunk)
            in_specs=[
                pl.BlockSpec((None, Tt, Bp, 4 * H), lambda d, i: (d, i, 0, 0)),
                pl.BlockSpec((None, H, 4 * H), lambda d, i: (d, 0, 0)),
            ],
            out_specs=(
                pl.BlockSpec((None, Tt, Bp, H), lambda d, i: (d, i, 0, 0)),
                pl.BlockSpec((None, Bp, H), lambda d, i: (d, 0, 0)),
                pl.BlockSpec((None, Bp, H), lambda d, i: (d, 0, 0)),
            ),
            scratch_shapes=[
                pltpu.VMEM((Bp, H), jnp.float32),   # h carry
                pltpu.VMEM((Bp, H), jnp.float32),   # c carry
            ],
        ),
        compiler_params=pltpu.CompilerParams(
            dimension_semantics=("parallel", "arbitrary"),
            vmem_limit_bytes=32 * 1024 * 1024,
        ),
    )(gx, whh)

    # backward outputs were stored in step order; flip along time here and
    # fuse with the final transpose/concat.
    outputs = jnp.concatenate([out[0, :, :B, :], out[1, ::-1, :B, :]], axis=-1)
    outputs = jnp.transpose(outputs, (1, 0, 2))                     # (B, T, 2H)
    hidden = jnp.concatenate([hN[0, :B], hN[1, :B]], axis=-1)[None]  # (1,B,2H)
    cell = jnp.concatenate([cN[0, :B], cN[1, :B]], axis=-1)[None]    # (1,B,2H)
    return outputs, hidden, cell


# ------------------------- pure-JAX reference (f32) -------------------------
def _ref_lstm_dir(x_tm, w_ih, w_hh, b, H):
    B = x_tm.shape[1]

    def step(carry, x_t):
        h, c = carry
        gates = x_t @ w_ih + h @ w_hh + b[0]
        i, f, g, o = jnp.split(gates, 4, axis=-1)
        i, f, o = jax.nn.sigmoid(i), jax.nn.sigmoid(f), jax.nn.sigmoid(o)
        g = jnp.tanh(g)
        c = f * c + i * g
        h = o * jnp.tanh(c)
        return (h, c), h

    init = (jnp.zeros((B, H), jnp.float32), jnp.zeros((B, H), jnp.float32))
    (hN, cN), outs = jax.lax.scan(step, init, x_tm)
    return outs, hN, cN


def _ref_encoder(tokens, params, H):
    emb = params["embedding"][tokens]
    x_tm = jnp.transpose(emb, (1, 0, 2)).astype(jnp.float32)
    of, hf, cf = _ref_lstm_dir(x_tm, params["w_ih_f"], params["w_hh_f"],
                               params["b_f"], H)
    ob, hb, cb = _ref_lstm_dir(x_tm[::-1], params["w_ih_b"], params["w_hh_b"],
                               params["b_b"], H)
    ob = ob[::-1]
    outputs = jnp.transpose(jnp.concatenate([of, ob], axis=-1), (1, 0, 2))
    hidden = jnp.concatenate([hf, hb], axis=1)[None]
    cell = jnp.concatenate([cf, cb], axis=1)[None]
    return outputs, hidden, cell


if __name__ == "__main__":
    input_dim, emb_dim, hidden_dim = 16, 32, 32
    B, T = 2, 8

    key = jax.random.PRNGKey(0)
    ks = jax.random.split(key, 8)
    bound = 1.0 / (hidden_dim ** 0.5)

    def u(kk, shape):
        return jax.random.uniform(kk, shape, jnp.float32, -bound, bound)

    # PyTorch's b_ih + b_hh are folded into a single bias per direction;
    # weights are stored pre-transposed (E or H, 4H) with gate order [i|f|g|o].
    params = {
        "embedding": jax.random.normal(ks[0], (input_dim, emb_dim), jnp.float32),
        "w_ih_f": u(ks[1], (emb_dim, 4 * hidden_dim)),
        "w_hh_f": u(ks[2], (hidden_dim, 4 * hidden_dim)),
        "b_f":    u(ks[3], (1, 4 * hidden_dim)),
        "w_ih_b": u(ks[4], (emb_dim, 4 * hidden_dim)),
        "w_hh_b": u(ks[5], (hidden_dim, 4 * hidden_dim)),
        "b_b":    u(ks[6], (1, 4 * hidden_dim)),
    }
    tokens = jax.random.randint(ks[7], (B, T), 0, input_dim, dtype=jnp.int32)

    run = jax.jit(encoder_forward, static_argnums=(2,))
    outputs, hidden, cell = run(tokens, params, hidden_dim)
    jax.block_until_ready((outputs, hidden, cell))

    assert outputs.shape == (B, T, 2 * hidden_dim)
    assert hidden.shape == (1, B, 2 * hidden_dim)
    assert cell.shape == (1, B, 2 * hidden_dim)

    # reference is pure f32; kernel streams gx/whh in bf16, so allow a
    # slightly looser tolerance for the compounded recurrent rounding.
    r_out, r_hid, r_cell = _ref_encoder(tokens, params, hidden_dim)
    assert bool(jnp.allclose(outputs, r_out, atol=2e-2, rtol=2e-2))
    assert bool(jnp.allclose(hidden, r_hid, atol=2e-2, rtol=2e-2))
    assert bool(jnp.allclose(cell, r_cell, atol=2e-2, rtol=2e-2))

    print("KERNEL_OK")
</pallas_src>

<mosaic_0001>
module attributes {stable_mosaic.version = 11 : i64} {
  func.func @_lstm_dir_kernel(%arg0: i32, %arg1: i32, %arg2: memref<1x8x16x128xbf16, #tpu.memory_space<vmem>>, %arg3: memref<1x32x128xbf16, #tpu.memory_space<vmem>>, %arg4: memref<1x8x16x32xf32, #tpu.memory_space<vmem>>, %arg5: memref<1x16x32xf32, #tpu.memory_space<vmem>>, %arg6: memref<1x16x32xf32, #tpu.memory_space<vmem>>, %arg7: memref<16x32xf32, #tpu.memory_space<vmem>>, %arg8: memref<16x32xf32, #tpu.memory_space<vmem>>) attributes {dimension_semantics = [#tpu.dimension_semantics<parallel>, #tpu.dimension_semantics<arbitrary>], iteration_bounds = array<i64: 2, 1>, scalar_prefetch = 0 : i64, scratch_operands = 2 : i64, tpu.core_type = #tpu.core_type<tc>, window_params = [{transform_indices = @transform_0, window_bounds = array<i64: 1, 8, 16, 128>}, {transform_indices = @transform_1, window_bounds = array<i64: 1, 32, 128>}, {transform_indices = @transform_2, window_bounds = array<i64: 1, 8, 16, 32>}, {transform_indices = @transform_3, window_bounds = array<i64: 1, 16, 32>}, {transform_indices = @transform_4, window_bounds = array<i64: 1, 16, 32>}]} {
    %c0_i32 = arith.constant 0 : i32
    %0 = arith.cmpi eq, %arg1, %c0_i32 : i32
    %1 = arith.extui %0 : i1 to i32
    %c0_i32_0 = arith.constant 0 : i32
    %2 = arith.cmpi ne, %1, %c0_i32_0 : i32
    scf.if %2 {
      %cst_133 = arith.constant 0.000000e+00 : f32
      %256 = vector.broadcast %cst_133 : f32 to vector<16x32xf32>
      %c0_134 = arith.constant 0 : index
      %c0_135 = arith.constant 0 : index
      %257 = vector.load %arg7[%c0_134, %c0_135] : memref<16x32xf32, #tpu.memory_space<vmem>>, vector<16x32xf32>
      tpu.vector_store %arg7[%c0_134, %c0_135], %256 {strides = array<i32>} : memref<16x32xf32, #tpu.memory_space<vmem>>, vector<16x32xf32>,
      %cst_136 = arith.constant 0.000000e+00 : f32
      %258 = vector.broadcast %cst_136 : f32 to vector<16x32xf32>
      %c0_137 = arith.constant 0 : index
      %c0_138 = arith.constant 0 : index
      %259 = vector.load %arg8[%c0_137, %c0_138] : memref<16x32xf32, #tpu.memory_space<vmem>>, vector<16x32xf32>
      tpu.vector_store %arg8[%c0_137, %c0_138], %258 {strides = array<i32>} : memref<16x32xf32, #tpu.memory_space<vmem>>, vector<16x32xf32>,
    } else {
    }
    %c0 = arith.constant 0 : index
    %c0_1 = arith.constant 0 : index
    %c0_2 = arith.constant 0 : index
    %3 = vector.load %arg3[%c0, %c0_1, %c0_2] : memref<1x32x128xbf16, #tpu.memory_space<vmem>>, vector<1x32x128xbf16>
    %4 = vector.shape_cast %3 : vector<1x32x128xbf16> to vector<32x128xbf16>
    %c0_i32_3 = arith.constant 0 : i32
    %c0_4 = arith.constant 0 : index
    %c0_5 = arith.constant 0 : index
    %5 = vector.load %arg7[%c0_4, %c0_5] : memref<16x32xf32, #tpu.memory_space<vmem>>, vector<16x32xf32>
    %c0_6 = arith.constant 0 : index
    %c0_7 = arith.constant 0 : index
    %6 = vector.load %arg8[%c0_6, %c0_7] : memref<16x32xf32, #tpu.memory_space<vmem>>, vector<16x32xf32>
    %c0_8 = arith.constant 0 : index
    %7 = arith.index_cast %c0_i32_3 : i32 to index
    %c0_9 = arith.constant 0 : index
    %c0_10 = arith.constant 0 : index
    %8 = vector.load %arg2[%c0_8, %7, %c0_9, %c0_10] : memref<1x8x16x128xbf16, #tpu.memory_space<vmem>>, vector<1x1x16x128xbf16>
    %9 = vector.shape_cast %8 : vector<1x1x16x128xbf16> to vector<16x128xbf16>
    %10 = arith.extf %9 : vector<16x128xbf16> to vector<16x128xf32>
    %11 = arith.truncf %5 : vector<16x32xf32> to vector<16x32xbf16>
    %cst = arith.constant dense<0.000000e+00> : vector<16x128xf32>
    %12 = tpu.matmul %11, %4, %cst {dimension_numbers = #tpu.dot_dimension_numbers<[1], [0], [0], [1], [0, 0, 1, 1], [], []>} : vector<16x32xbf16>, vector<32x128xbf16>, vector<16x128xf32> -> vector<16x128xf32>
    %13 = arith.addf %10, %12 : vector<16x128xf32>
    %14 = vector.extract_strided_slice %13 {offsets = [0, 0], sizes = [16, 96], strides = [1, 1]} : vector<16x128xf32> to vector<16x96xf32>
    %15 = arith.negf %14 : vector<16x96xf32>
    %16 = math.exp %15 : vector<16x96xf32>
    %cst_11 = arith.constant 1.000000e+00 : f32
    %17 = vector.broadcast %cst_11 : f32 to vector<16x96xf32>
    %18 = arith.addf %17, %16 : vector<16x96xf32>
    %19 = arith.divf %17, %18 : vector<16x96xf32>
    %20 = vector.extract_strided_slice %19 {offsets = [0, 0], sizes = [16, 32], strides = [1, 1]} : vector<16x96xf32> to vector<16x32xf32>
    %21 = vector.extract_strided_slice %19 {offsets = [0, 32], sizes = [16, 32], strides = [1, 1]} : vector<16x96xf32> to vector<16x32xf32>
    %22 = vector.extract_strided_slice %19 {offsets = [0, 64], sizes = [16, 32], strides = [1, 1]} : vector<16x96xf32> to vector<16x32xf32>
    %23 = vector.extract_strided_slice %13 {offsets = [0, 96], sizes = [16, 32], strides = [1, 1]} : vector<16x128xf32> to vector<16x32xf32>
    %24 = math.tanh %23 : vector<16x32xf32>
    %25 = arith.mulf %21, %6 : vector<16x32xf32>
    %26 = arith.mulf %20, %24 : vector<16x32xf32>
    %27 = arith.addf %25, %26 : vector<16x32xf32>
    %28 = math.tanh %27 : vector<16x32xf32>
    %29 = arith.mulf %22, %28 : vector<16x32xf32>
    %c0_12 = arith.constant 0 : index
    %30 = arith.index_cast %c0_i32_3 : i32 to index
    %c0_13 = arith.constant 0 : index
    %c0_14 = arith.constant 0 : index
    %31 = vector.load %arg4[%c0_12, %30, %c0_13, %c0_14] : memref<1x8x16x32xf32, #tpu.memory_space<vmem>>, vector<1x1x16x32xf32>
    %32 = vector.shape_cast %31 : vector<1x1x16x32xf32> to vector<16x32xf32>
    %33 = vector.shape_cast %29 : vector<16x32xf32> to vector<1x1x16x32xf32>
    tpu.vector_store %arg4[%c0_12, %30, %c0_13, %c0_14], %33 {strides = array<i32>} : memref<1x8x16x32xf32, #tpu.memory_space<vmem>>, vector<1x1x16x32xf32>,
    %c0_15 = arith.constant 0 : index
    %c0_16 = arith.constant 0 : index
    %34 = vector.load %arg7[%c0_15, %c0_16] : memref<16x32xf32, #tpu.memory_space<vmem>>, vector<16x32xf32>
    tpu.vector_store %arg7[%c0_15, %c0_16], %29 {strides = array<i32>} : memref<16x32xf32, #tpu.memory_space<vmem>>, vector<16x32xf32>,
    %c0_17 = arith.constant 0 : index
    %c0_18 = arith.constant 0 : index
    %35 = vector.load %arg8[%c0_17, %c0_18] : memref<16x32xf32, #tpu.memory_space<vmem>>, vector<16x32xf32>
    tpu.vector_store %arg8[%c0_17, %c0_18], %27 {strides = array<i32>} : memref<16x32xf32, #tpu.memory_space<vmem>>, vector<16x32xf32>,
    %c1_i32 = arith.constant 1 : i32
    %c0_19 = arith.constant 0 : index
    %c0_20 = arith.constant 0 : index
    %36 = vector.load %arg7[%c0_19, %c0_20] : memref<16x32xf32, #tpu.memory_space<vmem>>, vector<16x32xf32>
    %c0_21 = arith.constant 0 : index
    %c0_22 = arith.constant 0 : index
    %37 = vector.load %arg8[%c0_21, %c0_22] : memref<16x32xf32, #tpu.memory_space<vmem>>, vector<16x32xf32>
    %c0_23 = arith.constant 0 : index
    %38 = arith.index_cast %c1_i32 : i32 to index
    %c0_24 = arith.constant 0 : index
    %c0_25 = arith.constant 0 : index
    %39 = vector.load %arg2[%c0_23, %38, %c0_24, %c0_25] : memref<1x8x16x128xbf16, #tpu.memory_space<vmem>>, vector<1x1x16x128xbf16>
    %40 = vector.shape_cast %39 : vector<1x1x16x128xbf16> to vector<16x128xbf16>
    %41 = arith.extf %40 : vector<16x128xbf16> to vector<16x128xf32>
    %42 = arith.truncf %36 : vector<16x32xf32> to vector<16x32xbf16>
    %cst_26 = arith.constant dense<0.000000e+00> : vector<16x128xf32>
    %43 = tpu.matmul %42, %4, %cst_26 {dimension_numbers = #tpu.dot_dimension_numbers<[1], [0], [0], [1], [0, 0, 1, 1], [], []>} : vector<16x32xbf16>, vector<32x128xbf16>, vector<16x128xf32> -> vector<16x128xf32>
    %44 = arith.addf %41, %43 : vector<16x128xf32>
    %45 = vector.extract_strided_slice %44 {offsets = [0, 0], sizes = [16, 96], strides = [1, 1]} : vector<16x128xf32> to vector<16x96xf32>
    %46 = arith.negf %45 : vector<16x96xf32>
    %47 = math.exp %46 : vector<16x96xf32>
    %cst_27 = arith.constant 1.000000e+00 : f32
    %48 = vector.broadcast %cst_27 : f32 to vector<16x96xf32>
    %49 = arith.addf %48, %47 : vector<16x96xf32>
    %50 = arith.divf %48, %49 : vector<16x96xf32>
    %51 = vector.extract_strided_slice %50 {offsets = [0, 0], sizes = [16, 32], strides = [1, 1]} : vector<16x96xf32> to vector<16x32xf32>
    %52 = vector.extract_strided_slice %50 {offsets = [0, 32], sizes = [16, 32], strides = [1, 1]} : vector<16x96xf32> to vector<16x32xf32>
    %53 = vector.extract_strided_slice %50 {offsets = [0, 64], sizes = [16, 32], strides = [1, 1]} : vector<16x96xf32> to vector<16x32xf32>
    %54 = vector.extract_strided_slice %44 {offsets = [0, 96], sizes = [16, 32], strides = [1, 1]} : vector<16x128xf32> to vector<16x32xf32>
    %55 = math.tanh %54 : vector<16x32xf32>
    %56 = arith.mulf %52, %37 : vector<16x32xf32>
    %57 = arith.mulf %51, %55 : vector<16x32xf32>
    %58 = arith.addf %56, %57 : vector<16x32xf32>
    %59 = math.tanh %58 : vector<16x32xf32>
    %60 = arith.mulf %53, %59 : vector<16x32xf32>
    %c0_28 = arith.constant 0 : index
    %61 = arith.index_cast %c1_i32 : i32 to index
    %c0_29 = arith.constant 0 : index
    %c0_30 = arith.constant 0 : index
    %62 = vector.load %arg4[%c0_28, %61, %c0_29, %c0_30] : memref<1x8x16x32xf32, #tpu.memory_space<vmem>>, vector<1x1x16x32xf32>
    %63 = vector.shape_cast %62 : vector<1x1x16x32xf32> to vector<16x32xf32>
    %64 = vector.shape_cast %60 : vector<16x32xf32> to vector<1x1x16x32xf32>
    tpu.vector_store %arg4[%c0_28, %61, %c0_29, %c0_30], %64 {strides = array<i32>} : memref<1x8x16x32xf32, #tpu.memory_space<vmem>>, vector<1x1x16x32xf32>,
    %c0_31 = arith.constant 0 : index
    %c0_32 = arith.constant 0 : index
    %65 = vector.load %arg7[%c0_31, %c0_32] : memref<16x32xf32, #tpu.memory_space<vmem>>, vector<16x32xf32>
    tpu.vector_store %arg7[%c0_31, %c0_32], %60 {strides = array<i32>} : memref<16x32xf32, #tpu.memory_space<vmem>>, vector<16x32xf32>,
    %c0_33 = arith.constant 0 : index
    %c0_34 = arith.constant 0 : index
    %66 = vector.load %arg8[%c0_33, %c0_34] : memref<16x32xf32, #tpu.memory_space<vmem>>, vector<16x32xf32>
    tpu.vector_store %arg8[%c0_33, %c0_34], %58 {strides = array<i32>} : memref<16x32xf32, #tpu.memory_space<vmem>>, vector<16x32xf32>,
    %c2_i32 = arith.constant 2 : i32
    %c0_35 = arith.constant 0 : index
    %c0_36 = arith.constant 0 : index
    %67 = vector.load %arg7[%c0_35, %c0_36] : memref<16x32xf32, #tpu.memory_space<vmem>>, vector<16x32xf32>
    %c0_37 = arith.constant 0 : index
    %c0_38 = arith.constant 0 : index
    %68 = vector.load %arg8[%c0_37, %c0_38] : memref<16x32xf32, #tpu.memory_space<vmem>>, vector<16x32xf32>
    %c0_39 = arith.constant 0 : index
    %69 = arith.index_cast %c2_i32 : i32 to index
    %c0_40 = arith.constant 0 : index
    %c0_41 = arith.constant 0 : index
    %70 = vector.load %arg2[%c0_39, %69, %c0_40, %c0_41] : memref<1x8x16x128xbf16, #tpu.memory_space<vmem>>, vector<1x1x16x128xbf16>
    %71 = vector.shape_cast %70 : vector<1x1x16x128xbf16> to vector<16x128xbf16>
    %72 = arith.extf %71 : vector<16x128xbf16> to vector<16x128xf32>
    %73 = arith.truncf %67 : vector<16x32xf32> to vector<16x32xbf16>
    %cst_42 = arith.constant dense<0.000000e+00> : vector<16x128xf32>
    %74 = tpu.matmul %73, %4, %cst_42 {dimension_numbers = #tpu.dot_dimension_numbers<[1], [0], [0], [1], [0, 0, 1, 1], [], []>} : vector<16x32xbf16>, vector<32x128xbf16>, vector<16x128xf32> -> vector<16x128xf32>
    %75 = arith.addf %72, %74 : vector<16x128xf32>
    %76 = vector.extract_strided_slice %75 {offsets = [0, 0], sizes = [16, 96], strides = [1, 1]} : vector<16x128xf32> to vector<16x96xf32>
    %77 = arith.negf %76 : vector<16x96xf32>
    %78 = math.exp %77 : vector<16x96xf32>
    %cst_43 = arith.constant 1.000000e+00 : f32
    %79 = vector.broadcast %cst_43 : f32 to vector<16x96xf32>
    %80 = arith.addf %79, %78 : vector<16x96xf32>
    %81 = arith.divf %79, %80 : vector<16x96xf32>
    %82 = vector.extract_strided_slice %81 {offsets = [0, 0], sizes = [16, 32], strides = [1, 1]} : vector<16x96xf32> to vector<16x32xf32>
    %83 = vector.extract_strided_slice %81 {offsets = [0, 32], sizes = [16, 32], strides = [1, 1]} : vector<16x96xf32> to vector<16x32xf32>
    %84 = vector.extract_strided_slice %81 {offsets = [0, 64], sizes = [16, 32], strides = [1, 1]} : vector<16x96xf32> to vector<16x32xf32>
    %85 = vector.extract_strided_slice %75 {offsets = [0, 96], sizes = [16, 32], strides = [1, 1]} : vector<16x128xf32> to vector<16x32xf32>
    %86 = math.tanh %85 : vector<16x32xf32>
    %87 = arith.mulf %83, %68 : vector<16x32xf32>
    %88 = arith.mulf %82, %86 : vector<16x32xf32>
    %89 = arith.addf %87, %88 : vector<16x32xf32>
    %90 = math.tanh %89 : vector<16x32xf32>
    %91 = arith.mulf %84, %90 : vector<16x32xf32>
    %c0_44 = arith.constant 0 : index
    %92 = arith.index_cast %c2_i32 : i32 to index
    %c0_45 = arith.constant 0 : index
    %c0_46 = arith.constant 0 : index
    %93 = vector.load %arg4[%c0_44, %92, %c0_45, %c0_46] : memref<1x8x16x32xf32, #tpu.memory_space<vmem>>, vector<1x1x16x32xf32>
    %94 = vector.shape_cast %93 : vector<1x1x16x32xf32> to vector<16x32xf32>
    %95 = vector.shape_cast %91 : vector<16x32xf32> to vector<1x1x16x32xf32>
    tpu.vector_store %arg4[%c0_44, %92, %c0_45, %c0_46], %95 {strides = array<i32>} : memref<1x8x16x32xf32, #tpu.memory_space<vmem>>, vector<1x1x16x32xf32>,
    %c0_47 = arith.constant 0 : index
    %c0_48 = arith.constant 0 : index
    %96 = vector.load %arg7[%c0_47, %c0_48] : memref<16x32xf32, #tpu.memory_space<vmem>>, vector<16x32xf32>
    tpu.vector_store %arg7[%c0_47, %c0_48], %91 {strides = array<i32>} : memref<16x32xf32, #tpu.memory_space<vmem>>, vector<16x32xf32>,
    %c0_49 = arith.constant 0 : index
    %c0_50 = arith.constant 0 : index
    %97 = vector.load %arg8[%c0_49, %c0_50] : memref<16x32xf32, #tpu.memory_space<vmem>>, vector<16x32xf32>
    tpu.vector_store %arg8[%c0_49, %c0_50], %89 {strides = array<i32>} : memref<16x32xf32, #tpu.memory_space<vmem>>, vector<16x32xf32>,
    %c3_i32 = arith.constant 3 : i32
    %c0_51 = arith.constant 0 : index
    %c0_52 = arith.constant 0 : index
    %98 = vector.load %arg7[%c0_51, %c0_52] : memref<16x32xf32, #tpu.memory_space<vmem>>, vector<16x32xf32>
    %c0_53 = arith.constant 0 : index
    %c0_54 = arith.constant 0 : index
    %99 = vector.load %arg8[%c0_53, %c0_54] : memref<16x32xf32, #tpu.memory_space<vmem>>, vector<16x32xf32>
    %c0_55 = arith.constant 0 : index
    %100 = arith.index_cast %c3_i32 : i32 to index
    %c0_56 = arith.constant 0 : index
    %c0_57 = arith.constant 0 : index
    %101 = vector.load %arg2[%c0_55, %100, %c0_56, %c0_57] : memref<1x8x16x128xbf16, #tpu.memory_space<vmem>>, vector<1x1x16x128xbf16>
    %102 = vector.shape_cast %101 : vector<1x1x16x128xbf16> to vector<16x128xbf16>
    %103 = arith.extf %102 : vector<16x128xbf16> to vector<16x128xf32>
    %104 = arith.truncf %98 : vector<16x32xf32> to vector<16x32xbf16>
    %cst_58 = arith.constant dense<0.000000e+00> : vector<16x128xf32>
    %105 = tpu.matmul %104, %4, %cst_58 {dimension_numbers = #tpu.dot_dimension_numbers<[1], [0], [0], [1], [0, 0, 1, 1], [], []>} : vector<16x32xbf16>, vector<32x128xbf16>, vector<16x128xf32> -> vector<16x128xf32>
    %106 = arith.addf %103, %105 : vector<16x128xf32>
    %107 = vector.extract_strided_slice %106 {offsets = [0, 0], sizes = [16, 96], strides = [1, 1]} : vector<16x128xf32> to vector<16x96xf32>
    %108 = arith.negf %107 : vector<16x96xf32>
    %109 = math.exp %108 : vector<16x96xf32>
    %cst_59 = arith.constant 1.000000e+00 : f32
    %110 = vector.broadcast %cst_59 : f32 to vector<16x96xf32>
    %111 = arith.addf %110, %109 : vector<16x96xf32>
    %112 = arith.divf %110, %111 : vector<16x96xf32>
    %113 = vector.extract_strided_slice %112 {offsets = [0, 0], sizes = [16, 32], strides = [1, 1]} : vector<16x96xf32> to vector<16x32xf32>
    %114 = vector.extract_strided_slice %112 {offsets = [0, 32], sizes = [16, 32], strides = [1, 1]} : vector<16x96xf32> to vector<16x32xf32>
    %115 = vector.extract_strided_slice %112 {offsets = [0, 64], sizes = [16, 32], strides = [1, 1]} : vector<16x96xf32> to vector<16x32xf32>
    %116 = vector.extract_strided_slice %106 {offsets = [0, 96], sizes = [16, 32], strides = [1, 1]} : vector<16x128xf32> to vector<16x32xf32>
    %117 = math.tanh %116 : vector<16x32xf32>
    %118 = arith.mulf %114, %99 : vector<16x32xf32>
    %119 = arith.mulf %113, %117 : vector<16x32xf32>
    %120 = arith.addf %118, %119 : vector<16x32xf32>
    %121 = math.tanh %120 : vector<16x32xf32>
    %122 = arith.mulf %115, %121 : vector<16x32xf32>
    %c0_60 = arith.constant 0 : index
    %123 = arith.index_cast %c3_i32 : i32 to index
    %c0_61 = arith.constant 0 : index
    %c0_62 = arith.constant 0 : index
    %124 = vector.load %arg4[%c0_60, %123, %c0_61, %c0_62] : memref<1x8x16x32xf32, #tpu.memory_space<vmem>>, vector<1x1x16x32xf32>
    %125 = vector.shape_cast %124 : vector<1x1x16x32xf32> to vector<16x32xf32>
    %126 = vector.shape_cast %122 : vector<16x32xf32> to vector<1x1x16x32xf32>
    tpu.vector_store %arg4[%c0_60, %123, %c0_61, %c0_62], %126 {strides = array<i32>} : memref<1x8x16x32xf32, #tpu.memory_space<vmem>>, vector<1x1x16x32xf32>,
    %c0_63 = arith.constant 0 : index
    %c0_64 = arith.constant 0 : index
    %127 = vector.load %arg7[%c0_63, %c0_64] : memref<16x32xf32, #tpu.memory_space<vmem>>, vector<16x32xf32>
    tpu.vector_store %arg7[%c0_63, %c0_64], %122 {strides = array<i32>} : memref<16x32xf32, #tpu.memory_space<vmem>>, vector<16x32xf32>,
    %c0_65 = arith.constant 0 : index
    %c0_66 = arith.constant 0 : index
    %128 = vector.load %arg8[%c0_65, %c0_66] : memref<16x32xf32, #tpu.memory_space<vmem>>, vector<16x32xf32>
    tpu.vector_store %arg8[%c0_65, %c0_66], %120 {strides = array<i32>} : memref<16x32xf32, #tpu.memory_space<vmem>>, vector<16x32xf32>,
    %c4_i32 = arith.constant 4 : i32
    %c0_67 = arith.constant 0 : index
    %c0_68 = arith.constant 0 : index
    %129 = vector.load %arg7[%c0_67, %c0_68] : memref<16x32xf32, #tpu.memory_space<vmem>>, vector<16x32xf32>
    %c0_69 = arith.constant 0 : index
    %c0_70 = arith.constant 0 : index
    %130 = vector.load %arg8[%c0_69, %c0_70] : memref<16x32xf32, #tpu.memory_space<vmem>>, vector<16x32xf32>
    %c0_71 = arith.constant 0 : index
    %131 = arith.index_cast %c4_i32 : i32 to index
    %c0_72 = arith.constant 0 : index
    %c0_73 = arith.constant 0 : index
    %132 = vector.load %arg2[%c0_71, %131, %c0_72, %c0_73] : memref<1x8x16x128xbf16, #tpu.memory_space<vmem>>, vector<1x1x16x128xbf16>
    %133 = vector.shape_cast %132 : vector<1x1x16x128xbf16> to vector<16x128xbf16>
    %134 = arith.extf %133 : vector<16x128xbf16> to vector<16x128xf32>
    %135 = arith.truncf %129 : vector<16x32xf32> to vector<16x32xbf16>
    %cst_74 = arith.constant dense<0.000000e+00> : vector<16x128xf32>
    %136 = tpu.matmul %135, %4, %cst_74 {dimension_numbers = #tpu.dot_dimension_numbers<[1], [0], [0], [1], [0, 0, 1, 1], [], []>} : vector<16x32xbf16>, vector<32x128xbf16>, vector<16x128xf32> -> vector<16x128xf32>
    %137 = arith.addf %134, %136 : vector<16x128xf32>
    %138 = vector.extract_strided_slice %137 {offsets = [0, 0], sizes = [16, 96], strides = [1, 1]} : vector<16x128xf32> to vector<16x96xf32>
    %139 = arith.negf %138 : vector<16x96xf32>
    %140 = math.exp %139 : vector<16x96xf32>
    %cst_75 = arith.constant 1.000000e+00 : f32
    %141 = vector.broadcast %cst_75 : f32 to vector<16x96xf32>
    %142 = arith.addf %141, %140 : vector<16x96xf32>
    %143 = arith.divf %141, %142 : vector<16x96xf32>
    %144 = vector.extract_strided_slice %143 {offsets = [0, 0], sizes = [16, 32], strides = [1, 1]} : vector<16x96xf32> to vector<16x32xf32>
    %145 = vector.extract_strided_slice %143 {offsets = [0, 32], sizes = [16, 32], strides = [1, 1]} : vector<16x96xf32> to vector<16x32xf32>
    %146 = vector.extract_strided_slice %143 {offsets = [0, 64], sizes = [16, 32], strides = [1, 1]} : vector<16x96xf32> to vector<16x32xf32>
    %147 = vector.extract_strided_slice %137 {offsets = [0, 96], sizes = [16, 32], strides = [1, 1]} : vector<16x128xf32> to vector<16x32xf32>
    %148 = math.tanh %147 : vector<16x32xf32>
    %149 = arith.mulf %145, %130 : vector<16x32xf32>
    %150 = arith.mulf %144, %148 : vector<16x32xf32>
    %151 = arith.addf %149, %150 : vector<16x32xf32>
    %152 = math.tanh %151 : vector<16x32xf32>
    %153 = arith.mulf %146, %152 : vector<16x32xf32>
    %c0_76 = arith.constant 0 : index
    %154 = arith.index_cast %c4_i32 : i32 to index
    %c0_77 = arith.constant 0 : index
    %c0_78 = arith.constant 0 : index
    %155 = vector.load %arg4[%c0_76, %154, %c0_77, %c0_78] : memref<1x8x16x32xf32, #tpu.memory_space<vmem>>, vector<1x1x16x32xf32>
    %156 = vector.shape_cast %155 : vector<1x1x16x32xf32> to vector<16x32xf32>
    %157 = vector.shape_cast %153 : vector<16x32xf32> to vector<1x1x16x32xf32>
    tpu.vector_store %arg4[%c0_76, %154, %c0_77, %c0_78], %157 {strides = array<i32>} : memref<1x8x16x32xf32, #tpu.memory_space<vmem>>, vector<1x1x16x32xf32>,
    %c0_79 = arith.constant 0 : index
    %c0_80 = arith.constant 0 : index
    %158 = vector.load %arg7[%c0_79, %c0_80] : memref<16x32xf32, #tpu.memory_space<vmem>>, vector<16x32xf32>
    tpu.vector_store %arg7[%c0_79, %c0_80], %153 {strides = array<i32>} : memref<16x32xf32, #tpu.memory_space<vmem>>, vector<16x32xf32>,
    %c0_81 = arith.constant 0 : index
    %c0_82 = arith.constant 0 : index
    %159 = vector.load %arg8[%c0_81, %c0_82] : memref<16x32xf32, #tpu.memory_space<vmem>>, vector<16x32xf32>
    tpu.vector_store %arg8[%c0_81, %c0_82], %151 {strides = array<i32>} : memref<16x32xf32, #tpu.memory_space<vmem>>, vector<16x32xf32>,
    %c5_i32 = arith.constant 5 : i32
    %c0_83 = arith.constant 0 : index
    %c0_84 = arith.constant 0 : index
    %160 = vector.load %arg7[%c0_83, %c0_84] : memref<16x32xf32, #tpu.memory_space<vmem>>, vector<16x32xf32>
    %c0_85 = arith.constant 0 : index
    %c0_86 = arith.constant 0 : index
    %161 = vector.load %arg8[%c0_85, %c0_86] : memref<16x32xf32, #tpu.memory_space<vmem>>, vector<16x32xf32>
    %c0_87 = arith.constant 0 : index
    %162 = arith.index_cast %c5_i32 : i32 to index
    %c0_88 = arith.constant 0 : index
    %c0_89 = arith.constant 0 : index
    %163 = vector.load %arg2[%c0_87, %162, %c0_88, %c0_89] : memref<1x8x16x128xbf16, #tpu.memory_space<vmem>>, vector<1x1x16x128xbf16>
    %164 = vector.shape_cast %163 : vector<1x1x16x128xbf16> to vector<16x128xbf16>
    %165 = arith.extf %164 : vector<16x128xbf16> to vector<16x128xf32>
    %166 = arith.truncf %160 : vector<16x32xf32> to vector<16x32xbf16>
    %cst_90 = arith.constant dense<0.000000e+00> : vector<16x128xf32>
    %167 = tpu.matmul %166, %4, %cst_90 {dimension_numbers = #tpu.dot_dimension_numbers<[1], [0], [0], [1], [0, 0, 1, 1], [], []>} : vector<16x32xbf16>, vector<32x128xbf16>, vector<16x128xf32> -> vector<16x128xf32>
    %168 = arith.addf %165, %167 : vector<16x128xf32>
    %169 = vector.extract_strided_slice %168 {offsets = [0, 0], sizes = [16, 96], strides = [1, 1]} : vector<16x128xf32> to vector<16x96xf32>
    %170 = arith.negf %169 : vector<16x96xf32>
    %171 = math.exp %170 : vector<16x96xf32>
    %cst_91 = arith.constant 1.000000e+00 : f32
    %172 = vector.broadcast %cst_91 : f32 to vector<16x96xf32>
    %173 = arith.addf %172, %171 : vector<16x96xf32>
    %174 = arith.divf %172, %173 : vector<16x96xf32>
    %175 = vector.extract_strided_slice %174 {offsets = [0, 0], sizes = [16, 32], strides = [1, 1]} : vector<16x96xf32> to vector<16x32xf32>
    %176 = vector.extract_strided_slice %174 {offsets = [0, 32], sizes = [16, 32], strides = [1, 1]} : vector<16x96xf32> to vector<16x32xf32>
    %177 = vector.extract_strided_slice %174 {offsets = [0, 64], sizes = [16, 32], strides = [1, 1]} : vector<16x96xf32> to vector<16x32xf32>
    %178 = vector.extract_strided_slice %168 {offsets = [0, 96], sizes = [16, 32], strides = [1, 1]} : vector<16x128xf32> to vector<16x32xf32>
    %179 = math.tanh %178 : vector<16x32xf32>
    %180 = arith.mulf %176, %161 : vector<16x32xf32>
    %181 = arith.mulf %175, %179 : vector<16x32xf32>
    %182 = arith.addf %180, %181 : vector<16x32xf32>
    %183 = math.tanh %182 : vector<16x32xf32>
    %184 = arith.mulf %177, %183 : vector<16x32xf32>
    %c0_92 = arith.constant 0 : index
    %185 = arith.index_cast %c5_i32 : i32 to index
    %c0_93 = arith.constant 0 : index
    %c0_94 = arith.constant 0 : index
    %186 = vector.load %arg4[%c0_92, %185, %c0_93, %c0_94] : memref<1x8x16x32xf32, #tpu.memory_space<vmem>>, vector<1x1x16x32xf32>
    %187 = vector.shape_cast %186 : vector<1x1x16x32xf32> to vector<16x32xf32>
    %188 = vector.shape_cast %184 : vector<16x32xf32> to vector<1x1x16x32xf32>
    tpu.vector_store %arg4[%c0_92, %185, %c0_93, %c0_94], %188 {strides = array<i32>} : memref<1x8x16x32xf32, #tpu.memory_space<vmem>>, vector<1x1x16x32xf32>,
    %c0_95 = arith.constant 0 : index
    %c0_96 = arith.constant 0 : index
    %189 = vector.load %arg7[%c0_95, %c0_96] : memref<16x32xf32, #tpu.memory_space<vmem>>, vector<16x32xf32>
    tpu.vector_store %arg7[%c0_95, %c0_96], %184 {strides = array<i32>} : memref<16x32xf32, #tpu.memory_space<vmem>>, vector<16x32xf32>,
    %c0_97 = arith.constant 0 : index
    %c0_98 = arith.constant 0 : index
    %190 = vector.load %arg8[%c0_97, %c0_98] : memref<16x32xf32, #tpu.memory_space<vmem>>, vector<16x32xf32>
    tpu.vector_store %arg8[%c0_97, %c0_98], %182 {strides = array<i32>} : memref<16x32xf32, #tpu.memory_space<vmem>>, vector<16x32xf32>,
    %c6_i32 = arith.constant 6 : i32
    %c0_99 = arith.constant 0 : index
    %c0_100 = arith.constant 0 : index
    %191 = vector.load %arg7[%c0_99, %c0_100] : memref<16x32xf32, #tpu.memory_space<vmem>>, vector<16x32xf32>
    %c0_101 = arith.constant 0 : index
    %c0_102 = arith.constant 0 : index
    %192 = vector.load %arg8[%c0_101, %c0_102] : memref<16x32xf32, #tpu.memory_space<vmem>>, vector<16x32xf32>
    %c0_103 = arith.constant 0 : index
    %193 = arith.index_cast %c6_i32 : i32 to index
    %c0_104 = arith.constant 0 : index
    %c0_105 = arith.constant 0 : index
    %194 = vector.load %arg2[%c0_103, %193, %c0_104, %c0_105] : memref<1x8x16x128xbf16, #tpu.memory_space<vmem>>, vector<1x1x16x128xbf16>
    %195 = vector.shape_cast %194 : vector<1x1x16x128xbf16> to vector<16x128xbf16>
    %196 = arith.extf %195 : vector<16x128xbf16> to vector<16x128xf32>
    %197 = arith.truncf %191 : vector<16x32xf32> to vector<16x32xbf16>
    %cst_106 = arith.constant dense<0.000000e+00> : vector<16x128xf32>
    %198 = tpu.matmul %197, %4, %cst_106 {dimension_numbers = #tpu.dot_dimension_numbers<[1], [0], [0], [1], [0, 0, 1, 1], [], []>} : vector<16x32xbf16>, vector<32x128xbf16>, vector<16x128xf32> -> vector<16x128xf32>
    %199 = arith.addf %196, %198 : vector<16x128xf32>
    %200 = vector.extract_strided_slice %199 {offsets = [0, 0], sizes = [16, 96], strides = [1, 1]} : vector<16x128xf32> to vector<16x96xf32>
    %201 = arith.negf %200 : vector<16x96xf32>
    %202 = math.exp %201 : vector<16x96xf32>
    %cst_107 = arith.constant 1.000000e+00 : f32
    %203 = vector.broadcast %cst_107 : f32 to vector<16x96xf32>
    %204 = arith.addf %203, %202 : vector<16x96xf32>
    %205 = arith.divf %203, %204 : vector<16x96xf32>
    %206 = vector.extract_strided_slice %205 {offsets = [0, 0], sizes = [16, 32], strides = [1, 1]} : vector<16x96xf32> to vector<16x32xf32>
    %207 = vector.extract_strided_slice %205 {offsets = [0, 32], sizes = [16, 32], strides = [1, 1]} : vector<16x96xf32> to vector<16x32xf32>
    %208 = vector.extract_strided_slice %205 {offsets = [0, 64], sizes = [16, 32], strides = [1, 1]} : vector<16x96xf32> to vector<16x32xf32>
    %209 = vector.extract_strided_slice %199 {offsets = [0, 96], sizes = [16, 32], strides = [1, 1]} : vector<16x128xf32> to vector<16x32xf32>
    %210 = math.tanh %209 : vector<16x32xf32>
    %211 = arith.mulf %207, %192 : vector<16x32xf32>
    %212 = arith.mulf %206, %210 : vector<16x32xf32>
    %213 = arith.addf %211, %212 : vector<16x32xf32>
    %214 = math.tanh %213 : vector<16x32xf32>
    %215 = arith.mulf %208, %214 : vector<16x32xf32>
    %c0_108 = arith.constant 0 : index
    %216 = arith.index_cast %c6_i32 : i32 to index
    %c0_109 = arith.constant 0 : index
    %c0_110 = arith.constant 0 : index
    %217 = vector.load %arg4[%c0_108, %216, %c0_109, %c0_110] : memref<1x8x16x32xf32, #tpu.memory_space<vmem>>, vector<1x1x16x32xf32>
    %218 = vector.shape_cast %217 : vector<1x1x16x32xf32> to vector<16x32xf32>
    %219 = vector.shape_cast %215 : vector<16x32xf32> to vector<1x1x16x32xf32>
    tpu.vector_store %arg4[%c0_108, %216, %c0_109, %c0_110], %219 {strides = array<i32>} : memref<1x8x16x32xf32, #tpu.memory_space<vmem>>, vector<1x1x16x32xf32>,
    %c0_111 = arith.constant 0 : index
    %c0_112 = arith.constant 0 : index
    %220 = vector.load %arg7[%c0_111, %c0_112] : memref<16x32xf32, #tpu.memory_space<vmem>>, vector<16x32xf32>
    tpu.vector_store %arg7[%c0_111, %c0_112], %215 {strides = array<i32>} : memref<16x32xf32, #tpu.memory_space<vmem>>, vector<16x32xf32>,
    %c0_113 = arith.constant 0 : index
    %c0_114 = arith.constant 0 : index
    %221 = vector.load %arg8[%c0_113, %c0_114] : memref<16x32xf32, #tpu.memory_space<vmem>>, vector<16x32xf32>
    tpu.vector_store %arg8[%c0_113, %c0_114], %213 {strides = array<i32>} : memref<16x32xf32, #tpu.memory_space<vmem>>, vector<16x32xf32>,
    %c7_i32 = arith.constant 7 : i32
    %c0_115 = arith.constant 0 : index
    %c0_116 = arith.constant 0 : index
    %222 = vector.load %arg7[%c0_115, %c0_116] : memref<16x32xf32, #tpu.memory_space<vmem>>, vector<16x32xf32>
    %c0_117 = arith.constant 0 : index
    %c0_118 = arith.constant 0 : index
    %223 = vector.load %arg8[%c0_117, %c0_118] : memref<16x32xf32, #tpu.memory_space<vmem>>, vector<16x32xf32>
    %c0_119 = arith.constant 0 : index
    %224 = arith.index_cast %c7_i32 : i32 to index
    %c0_120 = arith.constant 0 : index
    %c0_121 = arith.constant 0 : index
    %225 = vector.load %arg2[%c0_119, %224, %c0_120, %c0_121] : memref<1x8x16x128xbf16, #tpu.memory_space<vmem>>, vector<1x1x16x128xbf16>
    %226 = vector.shape_cast %225 : vector<1x1x16x128xbf16> to vector<16x128xbf16>
    %227 = arith.extf %226 : vector<16x128xbf16> to vector<16x128xf32>
    %228 = arith.truncf %222 : vector<16x32xf32> to vector<16x32xbf16>
    %cst_122 = arith.constant dense<0.000000e+00> : vector<16x128xf32>
    %229 = tpu.matmul %228, %4, %cst_122 {dimension_numbers = #tpu.dot_dimension_numbers<[1], [0], [0], [1], [0, 0, 1, 1], [], []>} : vector<16x32xbf16>, vector<32x128xbf16>, vector<16x128xf32> -> vector<16x128xf32>
    %230 = arith.addf %227, %229 : vector<16x128xf32>
    %231 = vector.extract_strided_slice %230 {offsets = [0, 0], sizes = [16, 96], strides = [1, 1]} : vector<16x128xf32> to vector<16x96xf32>
    %232 = arith.negf %231 : vector<16x96xf32>
    %233 = math.exp %232 : vector<16x96xf32>
    %cst_123 = arith.constant 1.000000e+00 : f32
    %234 = vector.broadcast %cst_123 : f32 to vector<16x96xf32>
    %235 = arith.addf %234, %233 : vector<16x96xf32>
    %236 = arith.divf %234, %235 : vector<16x96xf32>
    %237 = vector.extract_strided_slice %236 {offsets = [0, 0], sizes = [16, 32], strides = [1, 1]} : vector<16x96xf32> to vector<16x32xf32>
    %238 = vector.extract_strided_slice %236 {offsets = [0, 32], sizes = [16, 32], strides = [1, 1]} : vector<16x96xf32> to vector<16x32xf32>
    %239 = vector.extract_strided_slice %236 {offsets = [0, 64], sizes = [16, 32], strides = [1, 1]} : vector<16x96xf32> to vector<16x32xf32>
    %240 = vector.extract_strided_slice %230 {offsets = [0, 96], sizes = [16, 32], strides = [1, 1]} : vector<16x128xf32> to vector<16x32xf32>
    %241 = math.tanh %240 : vector<16x32xf32>
    %242 = arith.mulf %238, %223 : vector<16x32xf32>
    %243 = arith.mulf %237, %241 : vector<16x32xf32>
    %244 = arith.addf %242, %243 : vector<16x32xf32>
    %245 = math.tanh %244 : vector<16x32xf32>
    %246 = arith.mulf %239, %245 : vector<16x32xf32>
    %c0_124 = arith.constant 0 : index
    %247 = arith.index_cast %c7_i32 : i32 to index
    %c0_125 = arith.constant 0 : index
    %c0_126 = arith.constant 0 : index
    %248 = vector.load %arg4[%c0_124, %247, %c0_125, %c0_126] : memref<1x8x16x32xf32, #tpu.memory_space<vmem>>, vector<1x1x16x32xf32>
    %249 = vector.shape_cast %248 : vector<1x1x16x32xf32> to vector<16x32xf32>
    %250 = vector.shape_cast %246 : vector<16x32xf32> to vector<1x1x16x32xf32>
    tpu.vector_store %arg4[%c0_124, %247, %c0_125, %c0_126], %250 {strides = array<i32>} : memref<1x8x16x32xf32, #tpu.memory_space<vmem>>, vector<1x1x16x32xf32>,
    %c0_127 = arith.constant 0 : index
    %c0_128 = arith.constant 0 : index
    %251 = vector.load %arg7[%c0_127, %c0_128] : memref<16x32xf32, #tpu.memory_space<vmem>>, vector<16x32xf32>
    tpu.vector_store %arg7[%c0_127, %c0_128], %246 {strides = array<i32>} : memref<16x32xf32, #tpu.memory_space<vmem>>, vector<16x32xf32>,
    %c0_129 = arith.constant 0 : index
    %c0_130 = arith.constant 0 : index
    %252 = vector.load %arg8[%c0_129, %c0_130] : memref<16x32xf32, #tpu.memory_space<vmem>>, vector<16x32xf32>
    tpu.vector_store %arg8[%c0_129, %c0_130], %244 {strides = array<i32>} : memref<16x32xf32, #tpu.memory_space<vmem>>, vector<16x32xf32>,
    %c8_i32 = arith.constant 8 : i32
    %c0_i32_131 = arith.constant 0 : i32
    %253 = arith.cmpi eq, %arg1, %c0_i32_131 : i32
    %254 = arith.extui %253 : i1 to i32
    %c0_i32_132 = arith.constant 0 : i32
    %255 = arith.cmpi ne, %254, %c0_i32_132 : i32
    scf.if %255 {
      %c0_133 = arith.constant 0 : index
      %c0_134 = arith.constant 0 : index
      %256 = vector.load %arg7[%c0_133, %c0_134] : memref<16x32xf32, #tpu.memory_space<vmem>>, vector<16x32xf32>
      %c0_135 = arith.constant 0 : index
      %c0_136 = arith.constant 0 : index
      %c0_137 = arith.constant 0 : index
      %257 = vector.load %arg5[%c0_135, %c0_136, %c0_137] : memref<1x16x32xf32, #tpu.memory_space<vmem>>, vector<1x16x32xf32>
      %258 = vector.shape_cast %257 : vector<1x16x32xf32> to vector<16x32xf32>
      %259 = vector.shape_cast %256 : vector<16x32xf32> to vector<1x16x32xf32>
      tpu.vector_store %arg5[%c0_135, %c0_136, %c0_137], %259 {strides = array<i32>} : memref<1x16x32xf32, #tpu.memory_space<vmem>>, vector<1x16x32xf32>,
      %c0_138 = arith.constant 0 : index
      %c0_139 = arith.constant 0 : index
      %260 = vector.load %arg8[%c0_138, %c0_139] : memref<16x32xf32, #tpu.memory_space<vmem>>, vector<16x32xf32>
      %c0_140 = arith.constant 0 : index
      %c0_141 = arith.constant 0 : index
      %c0_142 = arith.constant 0 : index
      %261 = vector.load %arg6[%c0_140, %c0_141, %c0_142] : memref<1x16x32xf32, #tpu.memory_space<vmem>>, vector<1x16x32xf32>
      %262 = vector.shape_cast %261 : vector<1x16x32xf32> to vector<16x32xf32>
      %263 = vector.shape_cast %260 : vector<16x32xf32> to vector<1x16x32xf32>
      tpu.vector_store %arg6[%c0_140, %c0_141, %c0_142], %263 {strides = array<i32>} : memref<1x16x32xf32, #tpu.memory_space<vmem>>, vector<1x16x32xf32>,
    } else {
    }
    return
  }
  func.func @transform_0(%arg0: i32, %arg1: i32) -> (i32, i32, i32, i32) {
    %c0_i32 = arith.constant 0 : i32
    %c0_i32_0 = arith.constant 0 : i32
    %c0_i32_1 = arith.constant 0 : i32
    return %arg0, %arg1, %c0_i32, %c0_i32_0 : i32, i32, i32, i32
  }
  func.func @transform_1(%arg0: i32, %arg1: i32) -> (i32, i32, i32) {
    %c0_i32 = arith.constant 0 : i32
    %c0_i32_0 = arith.constant 0 : i32
    %c0_i32_1 = arith.constant 0 : i32
    return %arg0, %c0_i32, %c0_i32_0 : i32, i32, i32
  }
  func.func @transform_2(%arg0: i32, %arg1: i32) -> (i32, i32, i32, i32) {
    %c0_i32 = arith.constant 0 : i32
    %c0_i32_0 = arith.constant 0 : i32
    %c0_i32_1 = arith.constant 0 : i32
    return %arg0, %arg1, %c0_i32, %c0_i32_0 : i32, i32, i32, i32
  }
  func.func @transform_3(%arg0: i32, %arg1: i32) -> (i32, i32, i32) {
    %c0_i32 = arith.constant 0 : i32
    %c0_i32_0 = arith.constant 0 : i32
    %c0_i32_1 = arith.constant 0 : i32
    return %arg0, %c0_i32, %c0_i32_0 : i32, i32, i32
  }
  func.func @transform_4(%arg0: i32, %arg1: i32) -> (i32, i32, i32) {
    %c0_i32 = arith.constant 0 : i32
    %c0_i32_0 = arith.constant 0 : i32
    %c0_i32_1 = arith.constant 0 : i32
    return %arg0, %c0_i32, %c0_i32_0 : i32, i32, i32
  }
}

</mosaic_0001>

<llo_original>
// kernel: encoder_forward.1
$region0: #{encoder_forward.1}
  #allocation0 [shape = 'u32[]', space=smem, size = 0x4, offset = 0x4, fixed_abs, tag = 'smem constant byte address 0x4 - core index']
  #allocation1 [shape = 'u32[144,128]{1,0:T(1,128)}', space=vmem, size = 0x12000, scoped, tag = 'internal scratch']
  #allocation2 [shape = 'f32[16,32]{1,0:T(8,128)}', space=vmem, size = 0x2000, scoped, tag = 'scratch operand']
  #allocation3 [shape = 'f32[16,32]{1,0:T(8,128)}', space=vmem, size = 0x2000, scoped, tag = 'scratch operand']
  %s0 = inlined_call_operand.vmem [shape: bf16[2,8,16,128], index: 0, kind: input, shape index: {}]
  %s1 = inlined_call_operand.vmem [shape: bf16[2,32,128], index: 1, kind: input, shape index: {}]
  %s2 = inlined_call_operand.vmem [shape: f32[2,8,16,32], index: 2, kind: output, shape index: {0}]
  %s3 = inlined_call_operand.vmem [shape: f32[2,16,32], index: 3, kind: output, shape index: {1}]
  %s4 = inlined_call_operand.vmem [shape: f32[2,16,32], index: 4, kind: output, shape index: {2}]
  %5 = xla_tuple %s2, %s3, %s4
  %s6 = sld [smem:[#allocation0]]
  $region65: #{encoder_forward.1} parent=0
    _
  %s8 = ssub.s32 1, %s6
  %s9 = scalar_select 0, %s8, %s6
  loop: start=0, step=1, limit=4
  $region2: #{encoder_forward.1} parent=0 // loop_pre_header
    _
  $region3: #{encoder_forward.1} parent=0 // loop_header
    %s11 = sphi 0, %s15
    %p12 = scmp.ge.s32.totalorder %s11, 4
    %s18 = sphi 0, %s30
    %s19 = sphi 0, %s26
    %s20 = sphi 0, %s18
    %s21 = sphi 0, %s19
    %s22 = sphi 0, %s20
    %s23 = sphi 0, %s21
    %s35 = sphi 0, %s37
    %s38 = sphi 0, %s35
    %s39 = sphi 0, %s38
    %s55 = sphi 0, %s39
    %s61 = sphi 0, %s63
    %s64 = sphi 0, %s61
    %s65 = sphi 0, %s64
    %s81 = sphi 0, %s65
    %s89 = sphi 0, %s91
    %s92 = sphi 0, %s89
    %s93 = sphi 0, %s92
    %s109 = sphi 0, %s93
    %s115 = sphi 0, %s117
    %s118 = sphi 0, %s115
    %s119 = sphi 0, %s118
    %s135 = sphi 0, %s119
    %s141 = sphi 0, %s143
    %s144 = sphi 0, %s141
    %s145 = sphi 0, %s144
    %s161 = sphi 0, %s145
  $region4: #{encoder_forward.1} parent=0 // loop_header_branch
    %14 = sbr.rel (%p12) target = $region8
  $region5: #{encoder_forward.1} parent=0 // loop_body
    %s16 = ssub.s32 %s11, 1
    %s17 = ssub.s32 %s11, 2
    %s24 = sadd.s32 1, %s19
    %p25 = scmp.ge.s32.totalorder %s24, 1
    %s26 = scalar_select %p25, 0, %s24
    %s27 = sadd.s32 1, %s18
    %s28 = scalar_select %p25, %s27, %s18
    %p29 = scmp.ge.s32.totalorder %s28, 2
    %s30 = scalar_select %p29, 0, %s28
    %s31 = ssub.s32 %s18, %s30
    %s32 = ssub.s32 %s19, %s26
    %s33 = sor.u32 %s31, %s32
    %p34 = scmp.eq.s32.totalorder %s33, 0
    %s36 = sadd.s32 %s35, 1
    %s37 = scalar_select %p34, %s35, %s36
    %p40 = pneg %p34
    %p41 = scmp.eq.s32.totalorder %s11, 1
    %p42 = por %p40, %p41
    %p43 = scmp.ne.s32.totalorder %s35, %s38
    %p44 = scmp.eq.s32.totalorder %s11, 0
    %p45 = por %p43, %p44
    %p46 = scmp.ne.s32.totalorder %s35, %s38
    %p47 = scmp.eq.s32.totalorder %s16, 1
    %p48 = por %p46, %p47
    %p49 = scmp.ne.s32.totalorder %s38, %s39
    %p50 = scmp.eq.s32.totalorder %s16, 0
    %p51 = por %p49, %p50
    %p52 = scmp.ne.s32.totalorder %s38, %s39
    %p53 = scmp.eq.s32.totalorder %s17, 1
    %p54 = por %p52, %p53
    %p56 = scmp.ne.s32.totalorder %s39, %s55
    %p57 = scmp.eq.s32.totalorder %s17, 0
    %p58 = por %p56, %p57
    %s59 = ssub.s32 %s18, %s30
    %p60 = scmp.eq.s32.totalorder %s59, 0
    %s62 = sadd.s32 %s61, 1
    %s63 = scalar_select %p60, %s61, %s62
    %p66 = pneg %p60
    %p67 = scmp.eq.s32.totalorder %s11, 1
    %p68 = por %p66, %p67
    %p69 = scmp.ne.s32.totalorder %s61, %s64
    %p70 = scmp.eq.s32.totalorder %s11, 0
    %p71 = por %p69, %p70
    %p72 = scmp.ne.s32.totalorder %s61, %s64
    %p73 = scmp.eq.s32.totalorder %s16, 1
    %p74 = por %p72, %p73
    %p75 = scmp.ne.s32.totalorder %s64, %s65
    %p76 = scmp.eq.s32.totalorder %s16, 0
    %p77 = por %p75, %p76
    %p78 = scmp.ne.s32.totalorder %s64, %s65
    %p79 = scmp.eq.s32.totalorder %s17, 1
    %p80 = por %p78, %p79
    %p82 = scmp.ne.s32.totalorder %s65, %s81
    %p83 = scmp.eq.s32.totalorder %s17, 0
    %p84 = por %p82, %p83
    %s85 = ssub.s32 %s18, %s30
    %s86 = ssub.s32 %s19, %s26
    %s87 = sor.u32 %s85, %s86
    %p88 = scmp.eq.s32.totalorder %s87, 0
    %s90 = sadd.s32 %s89, 1
    %s91 = scalar_select %p88, %s89, %s90
    %p94 = pneg %p88
    %p95 = scmp.eq.s32.totalorder %s11, 1
    %p96 = por %p94, %p95
    %p97 = scmp.ne.s32.totalorder %s89, %s92
    %p98 = scmp.eq.s32.totalorder %s11, 0
    %p99 = por %p97, %p98
    %p100 = scmp.ne.s32.totalorder %s89, %s92
    %p101 = scmp.eq.s32.totalorder %s16, 1
    %p102 = por %p100, %p101
    %p103 = scmp.ne.s32.totalorder %s92, %s93
    %p104 = scmp.eq.s32.totalorder %s16, 0
    %p105 = por %p103, %p104
    %p106 = scmp.ne.s32.totalorder %s92, %s93
    %p107 = scmp.eq.s32.totalorder %s17, 1
    %p108 = por %p106, %p107
    %p110 = scmp.ne.s32.totalorder %s93, %s109
    %p111 = scmp.eq.s32.totalorder %s17, 0
    %p112 = por %p110, %p111
    %s113 = ssub.s32 %s18, %s30
    %p114 = scmp.eq.s32.totalorder %s113, 0
    %s116 = sadd.s32 %s115, 1
    %s117 = scalar_select %p114, %s115, %s116
    %p120 = pneg %p114
    %p121 = scmp.eq.s32.totalorder %s11, 1
    %p122 = por %p120, %p121
    %p123 = scmp.ne.s32.totalorder %s115, %s118
    %p124 = scmp.eq.s32.totalorder %s11, 0
    %p125 = por %p123, %p124
    %p126 = scmp.ne.s32.totalorder %s115, %s118
    %p127 = scmp.eq.s32.totalorder %s16, 1
    %p128 = por %p126, %p127
    %p129 = scmp.ne.s32.totalorder %s118, %s119
    %p130 = scmp.eq.s32.totalorder %s16, 0
    %p131 = por %p129, %p130
    %p132 = scmp.ne.s32.totalorder %s118, %s119
    %p133 = scmp.eq.s32.totalorder %s17, 1
    %p134 = por %p132, %p133
    %p136 = scmp.ne.s32.totalorder %s119, %s135
    %p137 = scmp.eq.s32.totalorder %s17, 0
    %p138 = por %p136, %p137
    %s139 = ssub.s32 %s18, %s30
    %p140 = scmp.eq.s32.totalorder %s139, 0
    %s142 = sadd.s32 %s141, 1
    %s143 = scalar_select %p140, %s141, %s142
    %p146 = pneg %p140
    %p147 = scmp.eq.s32.totalorder %s11, 1
    %p148 = por %p146, %p147
    %p149 = scmp.ne.s32.totalorder %s141, %s144
    %p150 = scmp.eq.s32.totalorder %s11, 0
    %p151 = por %p149, %p150
    %p152 = scmp.ne.s32.totalorder %s141, %s144
    %p153 = scmp.eq.s32.totalorder %s16, 1
    %p154 = por %p152, %p153
    %p155 = scmp.ne.s32.totalorder %s144, %s145
    %p156 = scmp.eq.s32.totalorder %s16, 0
    %p157 = por %p155, %p156
    %p158 = scmp.ne.s32.totalorder %s144, %s145
    %p159 = scmp.eq.s32.totalorder %s17, 1
    %p160 = por %p158, %p159
    %p162 = scmp.ne.s32.totalorder %s145, %s161
    %p163 = scmp.eq.s32.totalorder %s17, 0
    %p164 = por %p162, %p163
    %p165 = scmp.le.s32.totalorder 1, %s11
    %p166 = scmp.lt.s32.totalorder %s11, 3
    %p167 = pnand %p165, %p166
    %p168 = pneg %p167
    // Predicated region
    $region9: #{encoder_forward.1} parent=5 // pred_check
      _
    $region10: #{encoder_forward.1} parent=5 // pred_check_branch
      %170 = sbr.rel (%p167) target = $region12
    $region11: #{encoder_forward.1} parent=5 // pred_region
      %s171 = ssub.s32 %s11, 1
    $region12: #{encoder_forward.1} parent=5 // pred_fallthru
      _
    %p172 = scmp.lt.s32.totalorder %s11, 2
    // Predicated region
    $region13: #{encoder_forward.1} parent=5 // pred_check
      %p173 = pneg %p172
    $region14: #{encoder_forward.1} parent=5 // pred_check_branch
      %175 = sbr.rel (%p173) target = $region16
    $region15: #{encoder_forward.1} parent=5 // pred_region
      // Predicated region
      $region17: #{encoder_forward.1} parent=15 // pred_check
        %p176 = pneg %p45
      $region18: #{encoder_forward.1} parent=15 // pred_check_branch
        %178 = sbr.rel (%p176) target = $region20
      $region19: #{encoder_forward.1} parent=15 // pred_region
        %s179 = smul.u32 8, %s19
        %p180 = scmp.lt.s32.totalorder %s18, 1
        %s181 = scalar_select %p180, %s18, 1
        %p182 = scmp.lt.s32.totalorder %s179, 7
        %s183 = scalar_select %p182, %s179, 7
        %s184 = smul.addr %s183, 2
        %s185 = smul.addr %s181, 16
        %s186 = sadd.s32 %s184, %s185
        %s187 = smul.addr %s186, 4
        %s188 = scalar_lea.vmem %s0, %s187
        %s189 = smul.u32 8, %s19
      $region20: #{encoder_forward.1} parent=15 // pred_fallthru
        _
      // Predicated region
      $region21: #{encoder_forward.1} parent=15 // pred_check
        %p190 = pneg %p71
      $region22: #{encoder_forward.1} parent=15 // pred_check_branch
        %192 = sbr.rel (%p190) target = $region24
      $region23: #{encoder_forward.1} parent=15 // pred_region
        %p193 = scmp.lt.s32.totalorder %s18, 1
        %s194 = scalar_select %p193, %s18, 1
        %s195 = smul.addr %s194, 4
        %s196 = smul.addr %s195, 4
        %s197 = scalar_lea.vmem %s1, %s196
      $region24: #{encoder_forward.1} parent=15 // pred_fallthru
        _
    $region16: #{encoder_forward.1} parent=5 // pred_fallthru
      _
    %p198 = scmp.le.s32.totalorder 1, %s11
    %p199 = scmp.lt.s32.totalorder %s11, 3
    %p200 = pnand %p198, %p199
    %p201 = pneg %p200
    // Predicated region
    $region25: #{encoder_forward.1} parent=5 // pred_check
      _
    $region26: #{encoder_forward.1} parent=5 // pred_check_branch
      %203 = sbr.rel (%p200) target = $region28
    $region27: #{encoder_forward.1} parent=5 // pred_region
      %s204 = ssub.s32 %s11, 1
      %s205 = smul.u32 8, %s21
      %p206 = scmp.lt.s32.totalorder %s20, 1
      %s207 = scalar_select %p206, %s20, 1
      %p208 = scmp.lt.s32.totalorder %s205, 7
      %s209 = scalar_select %p208, %s205, 7
      %s210 = smul.addr %s209, 2
      %s211 = smul.addr %s207, 16
      %s212 = sadd.s32 %s210, %s211
      %s213 = smul.addr %s212, 4
      %s214 = scalar_lea.vmem %s0, %s213
      %p215 = pneg %p51
      %p216 = pneg %p48
      %p217 = scmp.lt.s32.totalorder %s20, 1
      %s218 = scalar_select %p217, %s20, 1
      %s219 = smul.addr %s218, 4
      %s220 = smul.addr %s219, 4
      %s221 = scalar_lea.vmem %s1, %s220
      %p222 = pneg %p77
      %p223 = pneg %p74
      %p224 = pneg %p105
      %p225 = pneg %p102
      %s226 = smul.u32 8, %s21
      %p227 = scmp.lt.s32.totalorder %s20, 1
      %s228 = scalar_select %p227, %s20, 1
      %p229 = scmp.lt.s32.totalorder %s226, 7
      %s230 = scalar_select %p229, %s226, 7
      %s231 = smul.addr %s230, 2
      %s232 = smul.addr %s228, 16
      %s233 = sadd.s32 %s231, %s232
      %s234 = smul.addr %s233, 8
      %s235 = scalar_lea.vmem %s2, %s234
      %p236 = pneg %p131
      %p237 = pneg %p128
      %p238 = scmp.lt.s32.totalorder %s20, 1
      %s239 = scalar_select %p238, %s20, 1
      %s240 = smul.addr %s239, 2
      %s241 = smul.addr %s240, 8
      %s242 = scalar_lea.vmem %s3, %s241
      %p243 = pneg %p157
      %p244 = pneg %p154
      %p245 = scmp.lt.s32.totalorder %s20, 1
      %s246 = scalar_select %p245, %s20, 1
      %s247 = smul.addr %s246, 2
      %s248 = smul.addr %s247, 8
      %s249 = scalar_lea.vmem %s4, %s248
      %s250 = smul.u32 8, %s21
      %p251 = scmp.lt.s32.totalorder %s20, 1
      %s252 = scalar_select %p251, %s20, 1
      %p253 = scmp.lt.s32.totalorder %s250, 7
      %s254 = scalar_select %p253, %s250, 7
      %s255 = smul.addr %s254, 2
      %s256 = smul.addr %s252, 16
      %s257 = sadd.s32 %s255, %s256
      %s258 = smul.addr %s257, 4
      %s259 = scalar_lea.vmem %s0, %s258
      %s260 = smul.u32 8, %s21
      %p261 = scmp.lt.s32.totalorder %s20, 1
      %s262 = scalar_select %p261, %s20, 1
      %s263 = smul.addr %s262, 4
      %s264 = smul.addr %s263, 4
      %s265 = scalar_lea.vmem %s1, %s264
      %s266 = smul.u32 8, %s21
      %p267 = scmp.lt.s32.totalorder %s20, 1
      %s268 = scalar_select %p267, %s20, 1
      %p269 = scmp.lt.s32.totalorder %s266, 7
      %s270 = scalar_select %p269, %s266, 7
      %s271 = smul.addr %s270, 2
      %s272 = smul.addr %s268, 16
      %s273 = sadd.s32 %s271, %s272
      %s274 = smul.addr %s273, 8
      %s275 = scalar_lea.vmem %s2, %s274
      %s276 = smul.u32 8, %s21
      %p277 = scmp.lt.s32.totalorder %s20, 1
      %s278 = scalar_select %p277, %s20, 1
      %s279 = smul.addr %s278, 2
      %s280 = smul.addr %s279, 8
      %s281 = scalar_lea.vmem %s3, %s280
      %p282 = scmp.lt.s32.totalorder %s20, 1
      %s283 = scalar_select %p282, %s20, 1
      %s284 = smul.addr %s283, 2
      %s285 = smul.addr %s284, 8
      %s286 = scalar_lea.vmem %s4, %s285
      %p288 = scmp.eq.s32.totalorder %s21, 0
      // Predicated region
      $region29: #{encoder_forward.1} parent=27 // pred_check
        %p289 = pneg %p288
      $region30: #{encoder_forward.1} parent=27 // pred_check_branch
        %291 = sbr.rel (%p289) target = $region32
      $region31: #{encoder_forward.1} parent=27 // pred_region
        %vm292 = vcmask 261120
        %293 = vst.msk [vmem:[#allocation2] sm:$0xff] %vm292, 0.0
        %294 = vst.msk [vmem:[#allocation2 + $0x8] sm:$0xff] %vm292, 0.0
        %295 = vst.msk [vmem:[#allocation3] sm:$0xff] %vm292, 0.0
        %296 = vst.msk [vmem:[#allocation3 + $0x8] sm:$0xff] %vm292, 0.0
      $region32: #{encoder_forward.1} parent=27 // pred_fallthru
        _
      %v297 = vld [vmem:[%s265] sm:$0xf]
      %v298 = vld [vmem:[%s265 + $0x4] sm:$0xf]
      %v299 = vld [vmem:[%s265 + $0x8] sm:$0xf]
      %v300 = vld [vmem:[%s265 + $0xc] sm:$0xf]
      %v301 = vld [vmem:[#allocation2] sm:$0xff]
      %v302 = vld [vmem:[#allocation2 + $0x8] sm:$0xff]
      %v303 = vld [vmem:[#allocation3] sm:$0xff]
      %v304 = vld [vmem:[#allocation3 + $0x8] sm:$0xff]
      %v305 = vld [vmem:[%s259] sm:$0xf]
      %v306 = vld [vmem:[%s259 + $0x4] sm:$0xf]
      %v307 = vunpack.c.l.bf16 %v305
      %v308 = vunpack.c.l.bf16 %v306
      %v309 = vpack.c.bf16 %v302, %v301
      %v314 = vunpack.c.l.b16 %v297
      %v315 = vunpack.c.l.b16 %v298
      %v316 = vunpack.c.l.b16 %v299
      %v317 = vunpack.c.l.b16 %v300
      %v318 = vpack.c.b16 %v315, %v314
      %v319 = vpack.c.b16 %v317, %v316
      %vm322 = vcmask 261120
      %v324 = vsel %vm322, %v309, 0
      %326 = vmatprep.subr.bf16.mxu0 0
      %327 = vmatpush1.bf16.msra.mxu0 %v318
      %328 = vmatprep.subr.bf16.mxu0 0
      %329 = vmatpush1.bf16.msra.mxu0 %v319
      %330 = vmatprep.subr.bf16.mxu0 0
      %331 = vmatpush1.bf16.msra.mxu0 0
      %332 = vmatprep.subr.bf16.mxu0 0
      %333 = vmatpush1.bf16.msra.mxu0 0
      %334 = vmatprep.subr.bf16.mxu0 0
      %335 = vmatpush1.bf16.msra.mxu0 0
      %336 = vmatprep.subr.bf16.mxu0 0
      %337 = vmatpush1.bf16.msra.mxu0 0
      %338 = vmatprep.subr.bf16.mxu0 0
      %339 = vmatpush1.bf16.msra.mxu0 0
      %340 = vmatprep.subr.bf16.mxu0 0
      %341 = vmatpush1.bf16.msra.mxu0 0
      %342 = vmatprep.subr.bf16.mxu0 0
      %343 = vmatpush1.bf16.msra.mxu0 0
      %344 = vmatprep.subr.bf16.mxu0 0
      %345 = vmatpush1.bf16.msra.mxu0 0
      %346 = vmatprep.subr.bf16.mxu0 0
      %347 = vmatpush1.bf16.msra.mxu0 0
      %348 = vmatprep.subr.bf16.mxu0 0
      %349 = vmatpush1.bf16.msra.mxu0 0
      %350 = vmatprep.subr.bf16.mxu0 0
      %351 = vmatpush1.bf16.msra.mxu0 0
      %352 = vmatprep.subr.bf16.mxu0 0
      %353 = vmatpush1.bf16.msra.mxu0 0
      %354 = vmatprep.subr.bf16.mxu0 0
      %355 = vmatpush1.bf16.msra.mxu0 0
      %356 = vmatprep.subr.bf16.mxu0 0
      %357 = vmatpush1.bf16.msra.mxu0 0
      %358 = vmatprep.mubr.bf16.mxu0 0
      %359 = vmatmul.mubr.bf16.gmra.mrb[0].mxu0 %v324
      %v360 = vpop.f32.mrb[0].mxu0
      %v361 = vadd.f32 0.0, %v360
      %v362 = vpop.f32.mrb[0].mxu0
      %v363 = vpop.f32.mrb[0].mxu0
      %v364 = vadd.f32 0.0, %v363
      %v365 = vpop.f32.mrb[0].mxu0
      %366 = vdwg.mxu0
      %v367 = vadd.f32 %v307, %v361
      %v368 = vadd.f32 %v308, %v364
      %v369 = vxor.u32 %v367, 2147483648
      %v370 = vxor.u32 %v368, 2147483648
      %v371 = vmul.f32 %v369, 1.442695
      %v372 = vpow.pop %v371
      %v373 = vmul.f32 %v370, 1.442695
      %v374 = vpow.pop %v373
      %v375 = vadd.f32 %v372, 1.0
      %v376 = vadd.f32 %v374, 1.0
      %v377 = vrcp.pop %v375
      %v378 = vmul.f32 1.0, %v377
      %v379 = vrcp.pop %v376
      %v380 = vmul.f32 1.0, %v379
      %v381 = vtanh.pop %v367
      %v382 = vtanh.pop %v368
      %385 = vrot.lane.b32.xlu0 %v303, 32
      %v386 = vpop.permute.xlu0 %385
      %387 = vrot.lane.b32.xlu0 %v304, 32
      %v388 = vpop.permute.xlu0 %387
      %v391 = vmul.f32 %v378, %v386
      %v392 = vmul.f32 %v380, %v388
      %395 = vrot.lane.b32.xlu0 %v381, 32
      %v396 = vpop.permute.xlu0 %395
      %397 = vrot.lane.b32.xlu0 %v382, 32
      %v398 = vpop.permute.xlu0 %397
      %v401 = vmul.f32 %v378, %v396
      %v402 = vmul.f32 %v380, %v398
      %405 = vrot.lane.b32.xlu0 %v401, 32
      %v406 = vpop.permute.xlu0 %405
      %407 = vrot.lane.b32.xlu0 %v402, 32
      %v408 = vpop.permute.xlu0 %407
      %v411 = vadd.f32 %v391, %v406
      %v412 = vadd.f32 %v392, %v408
      %v413 = vtanh.pop %v411
      %v414 = vtanh.pop %v412
      %417 = vrot.lane.b32.xlu0 %v413, 32
      %v418 = vpop.permute.xlu0 %417
      %419 = vrot.lane.b32.xlu0 %v414, 32
      %v420 = vpop.permute.xlu0 %419
      %v423 = vmul.f32 %v378, %v418
      %v424 = vmul.f32 %v380, %v420
      %427 = vrot.lane.b32.xlu0 %v423, 64
      %v428 = vpop.permute.xlu0 %427
      %429 = vrot.lane.b32.xlu0 %v424, 64
      %v430 = vpop.permute.xlu0 %429
      %433 = vst.msk [vmem:[%s275] sm:$0xff] %vm322, %v428
      %434 = vst.msk [vmem:[%s275 + $0x8] sm:$0xff] %vm322, %v430
      %435 = vst.msk [vmem:[#allocation2] sm:$0xff] %vm322, %v428
      %436 = vst.msk [vmem:[#allocation2 + $0x8] sm:$0xff] %vm322, %v430
      %439 = vrot.lane.b32.xlu0 %v411, 96
      %v440 = vpop.permute.xlu0 %439
      %441 = vrot.lane.b32.xlu0 %v412, 96
      %v442 = vpop.permute.xlu0 %441
      %445 = vst.msk [vmem:[#allocation3] sm:$0xff] %vm322, %v440
      %446 = vst.msk [vmem:[#allocation3 + $0x8] sm:$0xff] %vm322, %v442
      %v447 = vld [vmem:[#allocation2] sm:$0xff]
      %v448 = vld [vmem:[#allocation2 + $0x8] sm:$0xff]
      %v449 = vld [vmem:[#allocation3] sm:$0xff]
      %v450 = vld [vmem:[#allocation3 + $0x8] sm:$0xff]
      %s451 = scalar_lea.vmem %s259, 8
      %v452 = vld [vmem:[%s451] sm:$0xf]
      %v453 = vld [vmem:[%s451 + $0x4] sm:$0xf]
      %v454 = vunpack.c.l.bf16 %v452
      %v455 = vunpack.c.l.bf16 %v453
      %v456 = vpack.c.bf16 %v448, %v447
      %v458 = vsel %vm322, %v456, 0
      %460 = vmatprep.subr.bf16.mxu0 0
      %461 = vmatpush1.bf16.msra.mxu0 %v318
      %462 = vmatprep.subr.bf16.mxu0 0
      %463 = vmatpush1.bf16.msra.mxu0 %v319
      %464 = vmatprep.subr.bf16.mxu0 0
      %465 = vmatpush1.bf16.msra.mxu0 0
      %466 = vmatprep.subr.bf16.mxu0 0
      %467 = vmatpush1.bf16.msra.mxu0 0
      %468 = vmatprep.subr.bf16.mxu0 0
      %469 = vmatpush1.bf16.msra.mxu0 0
      %470 = vmatprep.subr.bf16.mxu0 0
      %471 = vmatpush1.bf16.msra.mxu0 0
      %472 = vmatprep.subr.bf16.mxu0 0
      %473 = vmatpush1.bf16.msra.mxu0 0
      %474 = vmatprep.subr.bf16.mxu0 0
      %475 = vmatpush1.bf16.msra.mxu0 0
      %476 = vmatprep.subr.bf16.mxu0 0
      %477 = vmatpush1.bf16.msra.mxu0 0
      %478 = vmatprep.subr.bf16.mxu0 0
      %479 = vmatpush1.bf16.msra.mxu0 0
      %480 = vmatprep.subr.bf16.mxu0 0
      %481 = vmatpush1.bf16.msra.mxu0 0
      %482 = vmatprep.subr.bf16.mxu0 0
      %483 = vmatpush1.bf16.msra.mxu0 0
      %484 = vmatprep.subr.bf16.mxu0 0
      %485 = vmatpush1.bf16.msra.mxu0 0
      %486 = vmatprep.subr.bf16.mxu0 0
      %487 = vmatpush1.bf16.msra.mxu0 0
      %488 = vmatprep.subr.bf16.mxu0 0
      %489 = vmatpush1.bf16.msra.mxu0 0
      %490 = vmatprep.subr.bf16.mxu0 0
      %491 = vmatpush1.bf16.msra.mxu0 0
      %492 = vmatprep.mubr.bf16.mxu0 0
      %493 = vmatmul.mubr.bf16.gmra.mrb[0].mxu0 %v458
      %v494 = vpop.f32.mrb[0].mxu0
      %v495 = vadd.f32 0.0, %v494
      %v496 = vpop.f32.mrb[0].mxu0
      %v497 = vpop.f32.mrb[0].mxu0
      %v498 = vadd.f32 0.0, %v497
      %v499 = vpop.f32.mrb[0].mxu0
      %500 = vdwg.mxu0
      %v501 = vadd.f32 %v454, %v495
      %v502 = vadd.f32 %v455, %v498
      %v503 = vxor.u32 %v501, 2147483648
      %v504 = vxor.u32 %v502, 2147483648
      %v505 = vmul.f32 %v503, 1.442695
      %v506 = vpow.pop %v505
      %v507 = vmul.f32 %v504, 1.442695
      %v508 = vpow.pop %v507
      %v509 = vadd.f32 %v506, 1.0
      %v510 = vadd.f32 %v508, 1.0
      %v511 = vrcp.pop %v509
      %v512 = vmul.f32 1.0, %v511
      %v513 = vrcp.pop %v510
      %v514 = vmul.f32 1.0, %v513
      %v515 = vtanh.pop %v501
      %v516 = vtanh.pop %v502
      %519 = vrot.lane.b32.xlu0 %v449, 32
      %v520 = vpop.permute.xlu0 %519
      %521 = vrot.lane.b32.xlu0 %v450, 32
      %v522 = vpop.permute.xlu0 %521
      %v525 = vmul.f32 %v512, %v520
      %v526 = vmul.f32 %v514, %v522
      %529 = vrot.lane.b32.xlu0 %v515, 32
      %v530 = vpop.permute.xlu0 %529
      %531 = vrot.lane.b32.xlu0 %v516, 32
      %v532 = vpop.permute.xlu0 %531
      %v535 = vmul.f32 %v512, %v530
      %v536 = vmul.f32 %v514, %v532
      %539 = vrot.lane.b32.xlu0 %v535, 32
      %v540 = vpop.permute.xlu0 %539
      %541 = vrot.lane.b32.xlu0 %v536, 32
      %v542 = vpop.permute.xlu0 %541
      %v545 = vadd.f32 %v525, %v540
      %v546 = vadd.f32 %v526, %v542
      %v547 = vtanh.pop %v545
      %v548 = vtanh.pop %v546
      %551 = vrot.lane.b32.xlu0 %v547, 32
      %v552 = vpop.permute.xlu0 %551
      %553 = vrot.lane.b32.xlu0 %v548, 32
      %v554 = vpop.permute.xlu0 %553
      %v557 = vmul.f32 %v512, %v552
      %v558 = vmul.f32 %v514, %v554
      %561 = vrot.lane.b32.xlu0 %v557, 64
      %v562 = vpop.permute.xlu0 %561
      %563 = vrot.lane.b32.xlu0 %v558, 64
      %v564 = vpop.permute.xlu0 %563
      %s567 = scalar_lea.vmem %s275, 16
      %568 = vst.msk [vmem:[%s567] sm:$0xff] %vm322, %v562
      %569 = vst.msk [vmem:[%s567 + $0x8] sm:$0xff] %vm322, %v564
      %570 = vst.msk [vmem:[#allocation2] sm:$0xff] %vm322, %v562
      %571 = vst.msk [vmem:[#allocation2 + $0x8] sm:$0xff] %vm322, %v564
      %574 = vrot.lane.b32.xlu0 %v545, 96
      %v575 = vpop.permute.xlu0 %574
      %576 = vrot.lane.b32.xlu0 %v546, 96
      %v577 = vpop.permute.xlu0 %576
      %580 = vst.msk [vmem:[#allocation3] sm:$0xff] %vm322, %v575
      %581 = vst.msk [vmem:[#allocation3 + $0x8] sm:$0xff] %vm322, %v577
      %v582 = vld [vmem:[#allocation2] sm:$0xff]
      %v583 = vld [vmem:[#allocation2 + $0x8] sm:$0xff]
      %v584 = vld [vmem:[#allocation3] sm:$0xff]
      %v585 = vld [vmem:[#allocation3 + $0x8] sm:$0xff]
      %s586 = scalar_lea.vmem %s259, 16
      %v587 = vld [vmem:[%s586] sm:$0xf]
      %v588 = vld [vmem:[%s586 + $0x4] sm:$0xf]
      %v589 = vunpack.c.l.bf16 %v587
      %v590 = vunpack.c.l.bf16 %v588
      %v591 = vpack.c.bf16 %v583, %v582
      %v593 = vsel %vm322, %v591, 0
      %595 = vmatprep.subr.bf16.mxu0 0
      %596 = vmatpush1.bf16.msra.mxu0 %v318
      %597 = vmatprep.subr.bf16.mxu0 0
      %598 = vmatpush1.bf16.msra.mxu0 %v319
      %599 = vmatprep.subr.bf16.mxu0 0
      %600 = vmatpush1.bf16.msra.mxu0 0
      %601 = vmatprep.subr.bf16.mxu0 0
      %602 = vmatpush1.bf16.msra.mxu0 0
      %603 = vmatprep.subr.bf16.mxu0 0
      %604 = vmatpush1.bf16.msra.mxu0 0
      %605 = vmatprep.subr.bf16.mxu0 0
      %606 = vmatpush1.bf16.msra.mxu0 0
      %607 = vmatprep.subr.bf16.mxu0 0
      %608 = vmatpush1.bf16.msra.mxu0 0
      %609 = vmatprep.subr.bf16.mxu0 0
      %610 = vmatpush1.bf16.msra.mxu0 0
      %611 = vmatprep.subr.bf16.mxu0 0
      %612 = vmatpush1.bf16.msra.mxu0 0
      %613 = vmatprep.subr.bf16.mxu0 0
      %614 = vmatpush1.bf16.msra.mxu0 0
      %615 = vmatprep.subr.bf16.mxu0 0
      %616 = vmatpush1.bf16.msra.mxu0 0
      %617 = vmatprep.subr.bf16.mxu0 0
      %618 = vmatpush1.bf16.msra.mxu0 0
      %619 = vmatprep.subr.bf16.mxu0 0
      %620 = vmatpush1.bf16.msra.mxu0 0
      %621 = vmatprep.subr.bf16.mxu0 0
      %622 = vmatpush1.bf16.msra.mxu0 0
      %623 = vmatprep.subr.bf16.mxu0 0
      %624 = vmatpush1.bf16.msra.mxu0 0
      %625 = vmatprep.subr.bf16.mxu0 0
      %626 = vmatpush1.bf16.msra.mxu0 0
      %627 = vmatprep.mubr.bf16.mxu0 0
      %628 = vmatmul.mubr.bf16.gmra.mrb[0].mxu0 %v593
      %v629 = vpop.f32.mrb[0].mxu0
      %v630 = vadd.f32 0.0, %v629
      %v631 = vpop.f32.mrb[0].mxu0
      %v632 = vpop.f32.mrb[0].mxu0
      %v633 = vadd.f32 0.0, %v632
      %v634 = vpop.f32.mrb[0].mxu0
      %635 = vdwg.mxu0
      %v636 = vadd.f32 %v589, %v630
      %v637 = vadd.f32 %v590, %v633
      %v638 = vxor.u32 %v636, 2147483648
      %v639 = vxor.u32 %v637, 2147483648
      %v640 = vmul.f32 %v638, 1.442695
      %v641 = vpow.pop %v640
      %v642 = vmul.f32 %v639, 1.442695
      %v643 = vpow.pop %v642
      %v644 = vadd.f32 %v641, 1.0
      %v645 = vadd.f32 %v643, 1.0
      %v646 = vrcp.pop %v644
      %v647 = vmul.f32 1.0, %v646
      %v648 = vrcp.pop %v645
      %v649 = vmul.f32 1.0, %v648
      %v650 = vtanh.pop %v636
      %v651 = vtanh.pop %v637
      %654 = vrot.lane.b32.xlu0 %v584, 32
      %v655 = vpop.permute.xlu0 %654
      %656 = vrot.lane.b32.xlu0 %v585, 32
      %v657 = vpop.permute.xlu0 %656
      %v660 = vmul.f32 %v647, %v655
      %v661 = vmul.f32 %v649, %v657
      %664 = vrot.lane.b32.xlu0 %v650, 32
      %v665 = vpop.permute.xlu0 %664
      %666 = vrot.lane.b32.xlu0 %v651, 32
      %v667 = vpop.permute.xlu0 %666
      %v670 = vmul.f32 %v647, %v665
      %v671 = vmul.f32 %v649, %v667
      %674 = vrot.lane.b32.xlu0 %v670, 32
      %v675 = vpop.permute.xlu0 %674
      %676 = vrot.lane.b32.xlu0 %v671, 32
      %v677 = vpop.permute.xlu0 %676
      %v680 = vadd.f32 %v660, %v675
      %v681 = vadd.f32 %v661, %v677
      %v682 = vtanh.pop %v680
      %v683 = vtanh.pop %v681
      %686 = vrot.lane.b32.xlu0 %v682, 32
      %v687 = vpop.permute.xlu0 %686
      %688 = vrot.lane.b32.xlu0 %v683, 32
      %v689 = vpop.permute.xlu0 %688
      %v692 = vmul.f32 %v647, %v687
      %v693 = vmul.f32 %v649, %v689
      %696 = vrot.lane.b32.xlu0 %v692, 64
      %v697 = vpop.permute.xlu0 %696
      %698 = vrot.lane.b32.xlu0 %v693, 64
      %v699 = vpop.permute.xlu0 %698
      %s702 = scalar_lea.vmem %s275, 32
      %703 = vst.msk [vmem:[%s702] sm:$0xff] %vm322, %v697
      %704 = vst.msk [vmem:[%s702 + $0x8] sm:$0xff] %vm322, %v699
      %705 = vst.msk [vmem:[#allocation2] sm:$0xff] %vm322, %v697
      %706 = vst.msk [vmem:[#allocation2 + $0x8] sm:$0xff] %vm322, %v699
      %709 = vrot.lane.b32.xlu0 %v680, 96
      %v710 = vpop.permute.xlu0 %709
      %711 = vrot.lane.b32.xlu0 %v681, 96
      %v712 = vpop.permute.xlu0 %711
      %715 = vst.msk [vmem:[#allocation3] sm:$0xff] %vm322, %v710
      %716 = vst.msk [vmem:[#allocation3 + $0x8] sm:$0xff] %vm322, %v712
      %v717 = vld [vmem:[#allocation2] sm:$0xff]
      %v718 = vld [vmem:[#allocation2 + $0x8] sm:$0xff]
      %v719 = vld [vmem:[#allocation3] sm:$0xff]
      %v720 = vld [vmem:[#allocation3 + $0x8] sm:$0xff]
      %s721 = scalar_lea.vmem %s259, 24
      %v722 = vld [vmem:[%s721] sm:$0xf]
      %v723 = vld [vmem:[%s721 + $0x4] sm:$0xf]
      %v724 = vunpack.c.l.bf16 %v722
      %v725 = vunpack.c.l.bf16 %v723
      %v726 = vpack.c.bf16 %v718, %v717
      %v728 = vsel %vm322, %v726, 0
      %730 = vmatprep.subr.bf16.mxu0 0
      %731 = vmatpush1.bf16.msra.mxu0 %v318
      %732 = vmatprep.subr.bf16.mxu0 0
      %733 = vmatpush1.bf16.msra.mxu0 %v319
      %734 = vmatprep.subr.bf16.mxu0 0
      %735 = vmatpush1.bf16.msra.mxu0 0
      %736 = vmatprep.subr.bf16.mxu0 0
      %737 = vmatpush1.bf16.msra.mxu0 0
      %738 = vmatprep.subr.bf16.mxu0 0
      %739 = vmatpush1.bf16.msra.mxu0 0
      %740 = vmatprep.subr.bf16.mxu0 0
      %741 = vmatpush1.bf16.msra.mxu0 0
      %742 = vmatprep.subr.bf16.mxu0 0
      %743 = vmatpush1.bf16.msra.mxu0 0
      %744 = vmatprep.subr.bf16.mxu0 0
      %745 = vmatpush1.bf16.msra.mxu0 0
      %746 = vmatprep.subr.bf16.mxu0 0
      %747 = vmatpush1.bf16.msra.mxu0 0
      %748 = vmatprep.subr.bf16.mxu0 0
      %749 = vmatpush1.bf16.msra.mxu0 0
      %750 = vmatprep.subr.bf16.mxu0 0
      %751 = vmatpush1.bf16.msra.mxu0 0
      %752 = vmatprep.subr.bf16.mxu0 0
      %753 = vmatpush1.bf16.msra.mxu0 0
      %754 = vmatprep.subr.bf16.mxu0 0
      %755 = vmatpush1.bf16.msra.mxu0 0
      %756 = vmatprep.subr.bf16.mxu0 0
      %757 = vmatpush1.bf16.msra.mxu0 0
      %758 = vmatprep.subr.bf16.mxu0 0
      %759 = vmatpush1.bf16.msra.mxu0 0
      %760 = vmatprep.subr.bf16.mxu0 0
      %761 = vmatpush1.bf16.msra.mxu0 0
      %762 = vmatprep.mubr.bf16.mxu0 0
      %763 = vmatmul.mubr.bf16.gmra.mrb[0].mxu0 %v728
      %v764 = vpop.f32.mrb[0].mxu0
      %v765 = vadd.f32 0.0, %v764
      %v766 = vpop.f32.mrb[0].mxu0
      %v767 = vpop.f32.mrb[0].mxu0
      %v768 = vadd.f32 0.0, %v767
      %v769 = vpop.f32.mrb[0].mxu0
      %770 = vdwg.mxu0
      %v771 = vadd.f32 %v724, %v765
      %v772 = vadd.f32 %v725, %v768
      %v773 = vxor.u32 %v771, 2147483648
      %v774 = vxor.u32 %v772, 2147483648
      %v775 = vmul.f32 %v773, 1.442695
      %v776 = vpow.pop %v775
      %v777 = vmul.f32 %v774, 1.442695
      %v778 = vpow.pop %v777
      %v779 = vadd.f32 %v776, 1.0
      %v780 = vadd.f32 %v778, 1.0
      %v781 = vrcp.pop %v779
      %v782 = vmul.f32 1.0, %v781
      %v783 = vrcp.pop %v780
      %v784 = vmul.f32 1.0, %v783
      %v785 = vtanh.pop %v771
      %v786 = vtanh.pop %v772
      %789 = vrot.lane.b32.xlu0 %v719, 32
      %v790 = vpop.permute.xlu0 %789
      %791 = vrot.lane.b32.xlu0 %v720, 32
      %v792 = vpop.permute.xlu0 %791
      %v795 = vmul.f32 %v782, %v790
      %v796 = vmul.f32 %v784, %v792
      %799 = vrot.lane.b32.xlu0 %v785, 32
      %v800 = vpop.permute.xlu0 %799
      %801 = vrot.lane.b32.xlu0 %v786, 32
      %v802 = vpop.permute.xlu0 %801
      %v805 = vmul.f32 %v782, %v800
      %v806 = vmul.f32 %v784, %v802
      %809 = vrot.lane.b32.xlu0 %v805, 32
      %v810 = vpop.permute.xlu0 %809
      %811 = vrot.lane.b32.xlu0 %v806, 32
      %v812 = vpop.permute.xlu0 %811
      %v815 = vadd.f32 %v795, %v810
      %v816 = vadd.f32 %v796, %v812
      %v817 = vtanh.pop %v815
      %v818 = vtanh.pop %v816
      %821 = vrot.lane.b32.xlu0 %v817, 32
      %v822 = vpop.permute.xlu0 %821
      %823 = vrot.lane.b32.xlu0 %v818, 32
      %v824 = vpop.permute.xlu0 %823
      %v827 = vmul.f32 %v782, %v822
      %v828 = vmul.f32 %v784, %v824
      %831 = vrot.lane.b32.xlu0 %v827, 64
      %v832 = vpop.permute.xlu0 %831
      %833 = vrot.lane.b32.xlu0 %v828, 64
      %v834 = vpop.permute.xlu0 %833
      %s837 = scalar_lea.vmem %s275, 48
      %838 = vst.msk [vmem:[%s837] sm:$0xff] %vm322, %v832
      %839 = vst.msk [vmem:[%s837 + $0x8] sm:$0xff] %vm322, %v834
      %840 = vst.msk [vmem:[#allocation2] sm:$0xff] %vm322, %v832
      %841 = vst.msk [vmem:[#allocation2 + $0x8] sm:$0xff] %vm322, %v834
      %844 = vrot.lane.b32.xlu0 %v815, 96
      %v845 = vpop.permute.xlu0 %844
      %846 = vrot.lane.b32.xlu0 %v816, 96
      %v847 = vpop.permute.xlu0 %846
      %850 = vst.msk [vmem:[#allocation3] sm:$0xff] %vm322, %v845
      %851 = vst.msk [vmem:[#allocation3 + $0x8] sm:$0xff] %vm322, %v847
      %v852 = vld [vmem:[#allocation2] sm:$0xff]
      %v853 = vld [vmem:[#allocation2 + $0x8] sm:$0xff]
      %v854 = vld [vmem:[#allocation3] sm:$0xff]
      %v855 = vld [vmem:[#allocation3 + $0x8] sm:$0xff]
      %s856 = scalar_lea.vmem %s259, 32
      %v857 = vld [vmem:[%s856] sm:$0xf]
      %v858 = vld [vmem:[%s856 + $0x4] sm:$0xf]
      %v859 = vunpack.c.l.bf16 %v857
      %v860 = vunpack.c.l.bf16 %v858
      %v861 = vpack.c.bf16 %v853, %v852
      %v863 = vsel %vm322, %v861, 0
      %865 = vmatprep.subr.bf16.mxu0 0
      %866 = vmatpush1.bf16.msra.mxu0 %v318
      %867 = vmatprep.subr.bf16.mxu0 0
      %868 = vmatpush1.bf16.msra.mxu0 %v319
      %869 = vmatprep.subr.bf16.mxu0 0
      %870 = vmatpush1.bf16.msra.mxu0 0
      %871 = vmatprep.subr.bf16.mxu0 0
      %872 = vmatpush1.bf16.msra.mxu0 0
      %873 = vmatprep.subr.bf16.mxu0 0
      %874 = vmatpush1.bf16.msra.mxu0 0
      %875 = vmatprep.subr.bf16.mxu0 0
      %876 = vmatpush1.bf16.msra.mxu0 0
      %877 = vmatprep.subr.bf16.mxu0 0
      %878 = vmatpush1.bf16.msra.mxu0 0
      %879 = vmatprep.subr.bf16.mxu0 0
      %880 = vmatpush1.bf16.msra.mxu0 0
      %881 = vmatprep.subr.bf16.mxu0 0
      %882 = vmatpush1.bf16.msra.mxu0 0
      %883 = vmatprep.subr.bf16.mxu0 0
      %884 = vmatpush1.bf16.msra.mxu0 0
      %885 = vmatprep.subr.bf16.mxu0 0
      %886 = vmatpush1.bf16.msra.mxu0 0
      %887 = vmatprep.subr.bf16.mxu0 0
      %888 = vmatpush1.bf16.msra.mxu0 0
      %889 = vmatprep.subr.bf16.mxu0 0
      %890 = vmatpush1.bf16.msra.mxu0 0
      %891 = vmatprep.subr.bf16.mxu0 0
      %892 = vmatpush1.bf16.msra.mxu0 0
      %893 = vmatprep.subr.bf16.mxu0 0
      %894 = vmatpush1.bf16.msra.mxu0 0
      %895 = vmatprep.subr.bf16.mxu0 0
      %896 = vmatpush1.bf16.msra.mxu0 0
      %897 = vmatprep.mubr.bf16.mxu0 0
      %898 = vmatmul.mubr.bf16.gmra.mrb[0].mxu0 %v863
      %v899 = vpop.f32.mrb[0].mxu0
      %v900 = vadd.f32 0.0, %v899
      %v901 = vpop.f32.mrb[0].mxu0
      %v902 = vpop.f32.mrb[0].mxu0
      %v903 = vadd.f32 0.0, %v902
      %v904 = vpop.f32.mrb[0].mxu0
      %905 = vdwg.mxu0
      %v906 = vadd.f32 %v859, %v900
      %v907 = vadd.f32 %v860, %v903
      %v908 = vxor.u32 %v906, 2147483648
      %v909 = vxor.u32 %v907, 2147483648
      %v910 = vmul.f32 %v908, 1.442695
      %v911 = vpow.pop %v910
      %v912 = vmul.f32 %v909, 1.442695
      %v913 = vpow.pop %v912
      %v914 = vadd.f32 %v911, 1.0
      %v915 = vadd.f32 %v913, 1.0
      %v916 = vrcp.pop %v914
      %v917 = vmul.f32 1.0, %v916
      %v918 = vrcp.pop %v915
      %v919 = vmul.f32 1.0, %v918
      %v920 = vtanh.pop %v906
      %v921 = vtanh.pop %v907
      %924 = vrot.lane.b32.xlu0 %v854, 32
      %v925 = vpop.permute.xlu0 %924
      %926 = vrot.lane.b32.xlu0 %v855, 32
      %v927 = vpop.permute.xlu0 %926
      %v930 = vmul.f32 %v917, %v925
      %v931 = vmul.f32 %v919, %v927
      %934 = vrot.lane.b32.xlu0 %v920, 32
      %v935 = vpop.permute.xlu0 %934
      %936 = vrot.lane.b32.xlu0 %v921, 32
      %v937 = vpop.permute.xlu0 %936
      %v940 = vmul.f32 %v917, %v935
      %v941 = vmul.f32 %v919, %v937
      %944 = vrot.lane.b32.xlu0 %v940, 32
      %v945 = vpop.permute.xlu0 %944
      %946 = vrot.lane.b32.xlu0 %v941, 32
      %v947 = vpop.permute.xlu0 %946
      %v950 = vadd.f32 %v930, %v945
      %v951 = vadd.f32 %v931, %v947
      %v952 = vtanh.pop %v950
      %v953 = vtanh.pop %v951
      %956 = vrot.lane.b32.xlu0 %v952, 32
      %v957 = vpop.permute.xlu0 %956
      %958 = vrot.lane.b32.xlu0 %v953, 32
      %v959 = vpop.permute.xlu0 %958
      %v962 = vmul.f32 %v917, %v957
      %v963 = vmul.f32 %v919, %v959
      %966 = vrot.lane.b32.xlu0 %v962, 64
      %v967 = vpop.permute.xlu0 %966
      %968 = vrot.lane.b32.xlu0 %v963, 64
      %v969 = vpop.permute.xlu0 %968
      %s972 = scalar_lea.vmem %s275, 64
      %973 = vst.msk [vmem:[%s972] sm:$0xff] %vm322, %v967
      %974 = vst.msk [vmem:[%s972 + $0x8] sm:$0xff] %vm322, %v969
      %975 = vst.msk [vmem:[#allocation2] sm:$0xff] %vm322, %v967
      %976 = vst.msk [vmem:[#allocation2 + $0x8] sm:$0xff] %vm322, %v969
      %979 = vrot.lane.b32.xlu0 %v950, 96
      %v980 = vpop.permute.xlu0 %979
      %981 = vrot.lane.b32.xlu0 %v951, 96
      %v982 = vpop.permute.xlu0 %981
      %985 = vst.msk [vmem:[#allocation3] sm:$0xff] %vm322, %v980
      %986 = vst.msk [vmem:[#allocation3 + $0x8] sm:$0xff] %vm322, %v982
      %v987 = vld [vmem:[#allocation2] sm:$0xff]
      %v988 = vld [vmem:[#allocation2 + $0x8] sm:$0xff]
      %v989 = vld [vmem:[#allocation3] sm:$0xff]
      %v990 = vld [vmem:[#allocation3 + $0x8] sm:$0xff]
      %s991 = scalar_lea.vmem %s259, 40
      %v992 = vld [vmem:[%s991] sm:$0xf]
      %v993 = vld [vmem:[%s991 + $0x4] sm:$0xf]
      %v994 = vunpack.c.l.bf16 %v992
      %v995 = vunpack.c.l.bf16 %v993
      %v996 = vpack.c.bf16 %v988, %v987
      %v998 = vsel %vm322, %v996, 0
      %1000 = vmatprep.subr.bf16.mxu0 0
      %1001 = vmatpush1.bf16.msra.mxu0 %v318
      %1002 = vmatprep.subr.bf16.mxu0 0
      %1003 = vmatpush1.bf16.msra.mxu0 %v319
      %1004 = vmatprep.subr.bf16.mxu0 0
      %1005 = vmatpush1.bf16.msra.mxu0 0
      %1006 = vmatprep.subr.bf16.mxu0 0
      %1007 = vmatpush1.bf16.msra.mxu0 0
      %1008 = vmatprep.subr.bf16.mxu0 0
      %1009 = vmatpush1.bf16.msra.mxu0 0
      %1010 = vmatprep.subr.bf16.mxu0 0
      %1011 = vmatpush1.bf16.msra.mxu0 0
      %1012 = vmatprep.subr.bf16.mxu0 0
      %1013 = vmatpush1.bf16.msra.mxu0 0
      %1014 = vmatprep.subr.bf16.mxu0 0
      %1015 = vmatpush1.bf16.msra.mxu0 0
      %1016 = vmatprep.subr.bf16.mxu0 0
      %1017 = vmatpush1.bf16.msra.mxu0 0
      %1018 = vmatprep.subr.bf16.mxu0 0
      %1019 = vmatpush1.bf16.msra.mxu0 0
      %1020 = vmatprep.subr.bf16.mxu0 0
      %1021 = vmatpush1.bf16.msra.mxu0 0
      %1022 = vmatprep.subr.bf16.mxu0 0
      %1023 = vmatpush1.bf16.msra.mxu0 0
      %1024 = vmatprep.subr.bf16.mxu0 0
      %1025 = vmatpush1.bf16.msra.mxu0 0
      %1026 = vmatprep.subr.bf16.mxu0 0
      %1027 = vmatpush1.bf16.msra.mxu0 0
      %1028 = vmatprep.subr.bf16.mxu0 0
      %1029 = vmatpush1.bf16.msra.mxu0 0
      %1030 = vmatprep.subr.bf16.mxu0 0
      %1031 = vmatpush1.bf16.msra.mxu0 0
      %1032 = vmatprep.mubr.bf16.mxu0 0
      %1033 = vmatmul.mubr.bf16.gmra.mrb[0].mxu0 %v998
      %v1034 = vpop.f32.mrb[0].mxu0
      %v1035 = vadd.f32 0.0, %v1034
      %v1036 = vpop.f32.mrb[0].mxu0
      %v1037 = vpop.f32.mrb[0].mxu0
      %v1038 = vadd.f32 0.0, %v1037
      %v1039 = vpop.f32.mrb[0].mxu0
      %1040 = vdwg.mxu0
      %v1041 = vadd.f32 %v994, %v1035
      %v1042 = vadd.f32 %v995, %v1038
      %v1043 = vxor.u32 %v1041, 2147483648
      %v1044 = vxor.u32 %v1042, 2147483648
      %v1045 = vmul.f32 %v1043, 1.442695
      %v1046 = vpow.pop %v1045
      %v1047 = vmul.f32 %v1044, 1.442695
      %v1048 = vpow.pop %v1047
      %v1049 = vadd.f32 %v1046, 1.0
      %v1050 = vadd.f32 %v1048, 1.0
      %v1051 = vrcp.pop %v1049
      %v1052 = vmul.f32 1.0, %v1051
      %v1053 = vrcp.pop %v1050
      %v1054 = vmul.f32 1.0, %v1053
      %v1055 = vtanh.pop %v1041
      %v1056 = vtanh.pop %v1042
      %1059 = vrot.lane.b32.xlu0 %v989, 32
      %v1060 = vpop.permute.xlu0 %1059
      %1061 = vrot.lane.b32.xlu0 %v990, 32
      %v1062 = vpop.permute.xlu0 %1061
      %v1065 = vmul.f32 %v1052, %v1060
      %v1066 = vmul.f32 %v1054, %v1062
      %1069 = vrot.lane.b32.xlu0 %v1055, 32
      %v1070 = vpop.permute.xlu0 %1069
      %1071 = vrot.lane.b32.xlu0 %v1056, 32
      %v1072 = vpop.permute.xlu0 %1071
      %v1075 = vmul.f32 %v1052, %v1070
      %v1076 = vmul.f32 %v1054, %v1072
      %1079 = vrot.lane.b32.xlu0 %v1075, 32
      %v1080 = vpop.permute.xlu0 %1079
      %1081 = vrot.lane.b32.xlu0 %v1076, 32
      %v1082 = vpop.permute.xlu0 %1081
      %v1085 = vadd.f32 %v1065, %v1080
      %v1086 = vadd.f32 %v1066, %v1082
      %v1087 = vtanh.pop %v1085
      %v1088 = vtanh.pop %v1086
      %1091 = vrot.lane.b32.xlu0 %v1087, 32
      %v1092 = vpop.permute.xlu0 %1091
      %1093 = vrot.lane.b32.xlu0 %v1088, 32
      %v1094 = vpop.permute.xlu0 %1093
      %v1097 = vmul.f32 %v1052, %v1092
      %v1098 = vmul.f32 %v1054, %v1094
      %1101 = vrot.lane.b32.xlu0 %v1097, 64
      %v1102 = vpop.permute.xlu0 %1101
      %1103 = vrot.lane.b32.xlu0 %v1098, 64
      %v1104 = vpop.permute.xlu0 %1103
      %s1107 = scalar_lea.vmem %s275, 80
      %1108 = vst.msk [vmem:[%s1107] sm:$0xff] %vm322, %v1102
      %1109 = vst.msk [vmem:[%s1107 + $0x8] sm:$0xff] %vm322, %v1104
      %1110 = vst.msk [vmem:[#allocation2] sm:$0xff] %vm322, %v1102
      %1111 = vst.msk [vmem:[#allocation2 + $0x8] sm:$0xff] %vm322, %v1104
      %1114 = vrot.lane.b32.xlu0 %v1085, 96
      %v1115 = vpop.permute.xlu0 %1114
      %1116 = vrot.lane.b32.xlu0 %v1086, 96
      %v1117 = vpop.permute.xlu0 %1116
      %1120 = vst.msk [vmem:[#allocation3] sm:$0xff] %vm322, %v1115
      %1121 = vst.msk [vmem:[#allocation3 + $0x8] sm:$0xff] %vm322, %v1117
      %v1122 = vld [vmem:[#allocation2] sm:$0xff]
      %v1123 = vld [vmem:[#allocation2 + $0x8] sm:$0xff]
      %v1124 = vld [vmem:[#allocation3] sm:$0xff]
      %v1125 = vld [vmem:[#allocation3 + $0x8] sm:$0xff]
      %s1126 = scalar_lea.vmem %s259, 48
      %v1127 = vld [vmem:[%s1126] sm:$0xf]
      %v1128 = vld [vmem:[%s1126 + $0x4] sm:$0xf]
      %v1129 = vunpack.c.l.bf16 %v1127
      %v1130 = vunpack.c.l.bf16 %v1128
      %v1131 = vpack.c.bf16 %v1123, %v1122
      %v1133 = vsel %vm322, %v1131, 0
      %1135 = vmatprep.subr.bf16.mxu0 0
      %1136 = vmatpush1.bf16.msra.mxu0 %v318
      %1137 = vmatprep.subr.bf16.mxu0 0
      %1138 = vmatpush1.bf16.msra.mxu0 %v319
      %1139 = vmatprep.subr.bf16.mxu0 0
      %1140 = vmatpush1.bf16.msra.mxu0 0
      %1141 = vmatprep.subr.bf16.mxu0 0
      %1142 = vmatpush1.bf16.msra.mxu0 0
      %1143 = vmatprep.subr.bf16.mxu0 0
      %1144 = vmatpush1.bf16.msra.mxu0 0
      %1145 = vmatprep.subr.bf16.mxu0 0
      %1146 = vmatpush1.bf16.msra.mxu0 0
      %1147 = vmatprep.subr.bf16.mxu0 0
      %1148 = vmatpush1.bf16.msra.mxu0 0
      %1149 = vmatprep.subr.bf16.mxu0 0
      %1150 = vmatpush1.bf16.msra.mxu0 0
      %1151 = vmatprep.subr.bf16.mxu0 0
      %1152 = vmatpush1.bf16.msra.mxu0 0
      %1153 = vmatprep.subr.bf16.mxu0 0
      %1154 = vmatpush1.bf16.msra.mxu0 0
      %1155 = vmatprep.subr.bf16.mxu0 0
      %1156 = vmatpush1.bf16.msra.mxu0 0
      %1157 = vmatprep.subr.bf16.mxu0 0
      %1158 = vmatpush1.bf16.msra.mxu0 0
      %1159 = vmatprep.subr.bf16.mxu0 0
      %1160 = vmatpush1.bf16.msra.mxu0 0
      %1161 = vmatprep.subr.bf16.mxu0 0
      %1162 = vmatpush1.bf16.msra.mxu0 0
      %1163 = vmatprep.subr.bf16.mxu0 0
      %1164 = vmatpush1.bf16.msra.mxu0 0
      %1165 = vmatprep.subr.bf16.mxu0 0
      %1166 = vmatpush1.bf16.msra.mxu0 0
      %1167 = vmatprep.mubr.bf16.mxu0 0
      %1168 = vmatmul.mubr.bf16.gmra.mrb[0].mxu0 %v1133
      %v1169 = vpop.f32.mrb[0].mxu0
      %v1170 = vadd.f32 0.0, %v1169
      %v1171 = vpop.f32.mrb[0].mxu0
      %v1172 = vpop.f32.mrb[0].mxu0
      %v1173 = vadd.f32 0.0, %v1172
      %v1174 = vpop.f32.mrb[0].mxu0
      %1175 = vdwg.mxu0
      %v1176 = vadd.f32 %v1129, %v1170
      %v1177 = vadd.f32 %v1130, %v1173
      %v1178 = vxor.u32 %v1176, 2147483648
      %v1179 = vxor.u32 %v1177, 2147483648
      %v1180 = vmul.f32 %v1178, 1.442695
      %v1181 = vpow.pop %v1180
      %v1182 = vmul.f32 %v1179, 1.442695
      %v1183 = vpow.pop %v1182
      %v1184 = vadd.f32 %v1181, 1.0
      %v1185 = vadd.f32 %v1183, 1.0
      %v1186 = vrcp.pop %v1184
      %v1187 = vmul.f32 1.0, %v1186
      %v1188 = vrcp.pop %v1185
      %v1189 = vmul.f32 1.0, %v1188
      %v1190 = vtanh.pop %v1176
      %v1191 = vtanh.pop %v1177
      %1194 = vrot.lane.b32.xlu0 %v1124, 32
      %v1195 = vpop.permute.xlu0 %1194
      %1196 = vrot.lane.b32.xlu0 %v1125, 32
      %v1197 = vpop.permute.xlu0 %1196
      %v1200 = vmul.f32 %v1187, %v1195
      %v1201 = vmul.f32 %v1189, %v1197
      %1204 = vrot.lane.b32.xlu0 %v1190, 32
      %v1205 = vpop.permute.xlu0 %1204
      %1206 = vrot.lane.b32.xlu0 %v1191, 32
      %v1207 = vpop.permute.xlu0 %1206
      %v1210 = vmul.f32 %v1187, %v1205
      %v1211 = vmul.f32 %v1189, %v1207
      %1214 = vrot.lane.b32.xlu0 %v1210, 32
      %v1215 = vpop.permute.xlu0 %1214
      %1216 = vrot.lane.b32.xlu0 %v1211, 32
      %v1217 = vpop.permute.xlu0 %1216
      %v1220 = vadd.f32 %v1200, %v1215
      %v1221 = vadd.f32 %v1201, %v1217
      %v1222 = vtanh.pop %v1220
      %v1223 = vtanh.pop %v1221
      %1226 = vrot.lane.b32.xlu0 %v1222, 32
      %v1227 = vpop.permute.xlu0 %1226
      %1228 = vrot.lane.b32.xlu0 %v1223, 32
      %v1229 = vpop.permute.xlu0 %1228
      %v1232 = vmul.f32 %v1187, %v1227
      %v1233 = vmul.f32 %v1189, %v1229
      %1236 = vrot.lane.b32.xlu0 %v1232, 64
      %v1237 = vpop.permute.xlu0 %1236
      %1238 = vrot.lane.b32.xlu0 %v1233, 64
      %v1239 = vpop.permute.xlu0 %1238
      %s1242 = scalar_lea.vmem %s275, 96
      %1243 = vst.msk [vmem:[%s1242] sm:$0xff] %vm322, %v1237
      %1244 = vst.msk [vmem:[%s1242 + $0x8] sm:$0xff] %vm322, %v1239
      %1245 = vst.msk [vmem:[#allocation2] sm:$0xff] %vm322, %v1237
      %1246 = vst.msk [vmem:[#allocation2 + $0x8] sm:$0xff] %vm322, %v1239
      %1249 = vrot.lane.b32.xlu0 %v1220, 96
      %v1250 = vpop.permute.xlu0 %1249
      %1251 = vrot.lane.b32.xlu0 %v1221, 96
      %v1252 = vpop.permute.xlu0 %1251
      %1255 = vst.msk [vmem:[#allocation3] sm:$0xff] %vm322, %v1250
      %1256 = vst.msk [vmem:[#allocation3 + $0x8] sm:$0xff] %vm322, %v1252
      %v1257 = vld [vmem:[#allocation2] sm:$0xff]
      %v1258 = vld [vmem:[#allocation2 + $0x8] sm:$0xff]
      %v1259 = vld [vmem:[#allocation3] sm:$0xff]
      %v1260 = vld [vmem:[#allocation3 + $0x8] sm:$0xff]
      %s1261 = scalar_lea.vmem %s259, 56
      %v1262 = vld [vmem:[%s1261] sm:$0xf]
      %v1263 = vld [vmem:[%s1261 + $0x4] sm:$0xf]
      %v1264 = vunpack.c.l.bf16 %v1262
      %v1265 = vunpack.c.l.bf16 %v1263
      %v1266 = vpack.c.bf16 %v1258, %v1257
      %v1268 = vsel %vm322, %v1266, 0
      %1270 = vmatprep.subr.bf16.mxu0 0
      %1271 = vmatpush1.bf16.msra.mxu0 %v318
      %1272 = vmatprep.subr.bf16.mxu0 0
      %1273 = vmatpush1.bf16.msra.mxu0 %v319
      %1274 = vmatprep.subr.bf16.mxu0 0
      %1275 = vmatpush1.bf16.msra.mxu0 0
      %1276 = vmatprep.subr.bf16.mxu0 0
      %1277 = vmatpush1.bf16.msra.mxu0 0
      %1278 = vmatprep.subr.bf16.mxu0 0
      %1279 = vmatpush1.bf16.msra.mxu0 0
      %1280 = vmatprep.subr.bf16.mxu0 0
      %1281 = vmatpush1.bf16.msra.mxu0 0
      %1282 = vmatprep.subr.bf16.mxu0 0
      %1283 = vmatpush1.bf16.msra.mxu0 0
      %1284 = vmatprep.subr.bf16.mxu0 0
      %1285 = vmatpush1.bf16.msra.mxu0 0
      %1286 = vmatprep.subr.bf16.mxu0 0
      %1287 = vmatpush1.bf16.msra.mxu0 0
      %1288 = vmatprep.subr.bf16.mxu0 0
      %1289 = vmatpush1.bf16.msra.mxu0 0
      %1290 = vmatprep.subr.bf16.mxu0 0
      %1291 = vmatpush1.bf16.msra.mxu0 0
      %1292 = vmatprep.subr.bf16.mxu0 0
      %1293 = vmatpush1.bf16.msra.mxu0 0
      %1294 = vmatprep.subr.bf16.mxu0 0
      %1295 = vmatpush1.bf16.msra.mxu0 0
      %1296 = vmatprep.subr.bf16.mxu0 0
      %1297 = vmatpush1.bf16.msra.mxu0 0
      %1298 = vmatprep.subr.bf16.mxu0 0
      %1299 = vmatpush1.bf16.msra.mxu0 0
      %1300 = vmatprep.subr.bf16.mxu0 0
      %1301 = vmatpush1.bf16.msra.mxu0 0
      %1302 = vmatprep.mubr.bf16.mxu0 0
      %1303 = vmatmul.mubr.bf16.gmra.mrb[0].mxu0 %v1268
      %v1304 = vpop.f32.mrb[0].mxu0
      %v1305 = vadd.f32 0.0, %v1304
      %v1306 = vpop.f32.mrb[0].mxu0
      %v1307 = vpop.f32.mrb[0].mxu0
      %v1308 = vadd.f32 0.0, %v1307
      %v1309 = vpop.f32.mrb[0].mxu0
      %1310 = vdwg.mxu0
      %v1311 = vadd.f32 %v1264, %v1305
      %v1312 = vadd.f32 %v1265, %v1308
      %v1313 = vxor.u32 %v1311, 2147483648
      %v1314 = vxor.u32 %v1312, 2147483648
      %v1315 = vmul.f32 %v1313, 1.442695
      %v1316 = vpow.pop %v1315
      %v1317 = vmul.f32 %v1314, 1.442695
      %v1318 = vpow.pop %v1317
      %v1319 = vadd.f32 %v1316, 1.0
      %v1320 = vadd.f32 %v1318, 1.0
      %v1321 = vrcp.pop %v1319
      %v1322 = vmul.f32 1.0, %v1321
      %v1323 = vrcp.pop %v1320
      %v1324 = vmul.f32 1.0, %v1323
      %v1325 = vtanh.pop %v1311
      %v1326 = vtanh.pop %v1312
      %1329 = vrot.lane.b32.xlu0 %v1259, 32
      %v1330 = vpop.permute.xlu0 %1329
      %1331 = vrot.lane.b32.xlu0 %v1260, 32
      %v1332 = vpop.permute.xlu0 %1331
      %v1335 = vmul.f32 %v1322, %v1330
      %v1336 = vmul.f32 %v1324, %v1332
      %1339 = vrot.lane.b32.xlu0 %v1325, 32
      %v1340 = vpop.permute.xlu0 %1339
      %1341 = vrot.lane.b32.xlu0 %v1326, 32
      %v1342 = vpop.permute.xlu0 %1341
      %v1345 = vmul.f32 %v1322, %v1340
      %v1346 = vmul.f32 %v1324, %v1342
      %1349 = vrot.lane.b32.xlu0 %v1345, 32
      %v1350 = vpop.permute.xlu0 %1349
      %1351 = vrot.lane.b32.xlu0 %v1346, 32
      %v1352 = vpop.permute.xlu0 %1351
      %v1355 = vadd.f32 %v1335, %v1350
      %v1356 = vadd.f32 %v1336, %v1352
      %v1357 = vtanh.pop %v1355
      %v1358 = vtanh.pop %v1356
      %1361 = vrot.lane.b32.xlu0 %v1357, 32
      %v1362 = vpop.permute.xlu0 %1361
      %1363 = vrot.lane.b32.xlu0 %v1358, 32
      %v1364 = vpop.permute.xlu0 %1363
      %v1367 = vmul.f32 %v1322, %v1362
      %v1368 = vmul.f32 %v1324, %v1364
      %1371 = vrot.lane.b32.xlu0 %v1367, 64
      %v1372 = vpop.permute.xlu0 %1371
      %1373 = vrot.lane.b32.xlu0 %v1368, 64
      %v1374 = vpop.permute.xlu0 %1373
      %s1377 = scalar_lea.vmem %s275, 112
      %1378 = vst.msk [vmem:[%s1377] sm:$0xff] %vm322, %v1372
      %1379 = vst.msk [vmem:[%s1377 + $0x8] sm:$0xff] %vm322, %v1374
      %1380 = vst.msk [vmem:[#allocation2] sm:$0xff] %vm322, %v1372
      %1381 = vst.msk [vmem:[#allocation2 + $0x8] sm:$0xff] %vm322, %v1374
      %1384 = vrot.lane.b32.xlu0 %v1355, 96
      %v1385 = vpop.permute.xlu0 %1384
      %1386 = vrot.lane.b32.xlu0 %v1356, 96
      %v1387 = vpop.permute.xlu0 %1386
      %1390 = vst.msk [vmem:[#allocation3] sm:$0xff] %vm322, %v1385
      %1391 = vst.msk [vmem:[#allocation3 + $0x8] sm:$0xff] %vm322, %v1387
      // Predicated region
      $region33: #{encoder_forward.1} parent=27 // pred_check
        %p1392 = pneg %p288
      $region34: #{encoder_forward.1} parent=27 // pred_check_branch
        %1394 = sbr.rel (%p1392) target = $region36
      $region35: #{encoder_forward.1} parent=27 // pred_region
        %v1395 = vld [vmem:[#allocation2] sm:$0xff]
        %v1396 = vld [vmem:[#allocation2 + $0x8] sm:$0xff]
        %1397 = vst.msk [vmem:[%s281] sm:$0xff] %vm322, %v1395
        %1398 = vst.msk [vmem:[%s281 + $0x8] sm:$0xff] %vm322, %v1396
        %v1399 = vld [vmem:[#allocation3] sm:$0xff]
        %v1400 = vld [vmem:[#allocation3 + $0x8] sm:$0xff]
        %1401 = vst.msk [vmem:[%s286] sm:$0xff] %vm322, %v1399
        %1402 = vst.msk [vmem:[%s286 + $0x8] sm:$0xff] %vm322, %v1400
      $region36: #{encoder_forward.1} parent=27 // pred_fallthru
        _
      %s1403 = smul.u32 8, %s21
      %p1404 = scmp.lt.s32.totalorder %s20, 1
      %s1405 = scalar_select %p1404, %s20, 1
      %p1406 = scmp.lt.s32.totalorder %s1403, 7
      %s1407 = scalar_select %p1406, %s1403, 7
      %s1408 = smul.addr %s1407, 2
      %s1409 = smul.addr %s1405, 16
      %s1410 = sadd.s32 %s1408, %s1409
      %s1411 = smul.addr %s1410, 8
      %s1412 = scalar_lea.vmem %s2, %s1411
      %p1413 = scmp.lt.s32.totalorder %s20, 1
      %s1414 = scalar_select %p1413, %s20, 1
      %s1415 = smul.addr %s1414, 2
      %s1416 = smul.addr %s1415, 8
      %s1417 = scalar_lea.vmem %s3, %s1416
      %p1418 = scmp.lt.s32.totalorder %s20, 1
      %s1419 = scalar_select %p1418, %s20, 1
      %s1420 = smul.addr %s1419, 2
      %s1421 = smul.addr %s1420, 8
      %s1422 = scalar_lea.vmem %s4, %s1421
      // Predicated region
      $region37: #{encoder_forward.1} parent=27 // pred_check
        %p1423 = pneg %p102
      $region38: #{encoder_forward.1} parent=27 // pred_check_branch
        %1425 = sbr.rel (%p1423) target = $region40
      $region39: #{encoder_forward.1} parent=27 // pred_region
        %s1426 = smul.u32 8, %s21
      $region40: #{encoder_forward.1} parent=27 // pred_fallthru
        _
      // Predicated region
      $region41: #{encoder_forward.1} parent=27 // pred_check
        %p1427 = pneg %p128
      $region42: #{encoder_forward.1} parent=27 // pred_check_branch
        %1429 = sbr.rel (%p1427) target = $region44
      $region43: #{encoder_forward.1} parent=27 // pred_region
        _
      $region44: #{encoder_forward.1} parent=27 // pred_fallthru
        _
      // Predicated region
      $region45: #{encoder_forward.1} parent=27 // pred_check
        %p1430 = pneg %p154
      $region46: #{encoder_forward.1} parent=27 // pred_check_branch
        %1432 = sbr.rel (%p1430) target = $region48
      $region47: #{encoder_forward.1} parent=27 // pred_region
        _
      $region48: #{encoder_forward.1} parent=27 // pred_fallthru
        _
    $region28: #{encoder_forward.1} parent=5 // pred_fallthru
      _
    %p1433 = scmp.le.s32.totalorder 2, %s11
    // Predicated region
    $region49: #{encoder_forward.1} parent=5 // pred_check
      %p1434 = pneg %p1433
    $region50: #{encoder_forward.1} parent=5 // pred_check_branch
      %1436 = sbr.rel (%p1434) target = $region52
    $region51: #{encoder_forward.1} parent=5 // pred_region
      %s1437 = ssub.s32 %s11, 2
      // Predicated region
      $region53: #{encoder_forward.1} parent=51 // pred_check
        %p1438 = pneg %p108
      $region54: #{encoder_forward.1} parent=51 // pred_check_branch
        %1440 = sbr.rel (%p1438) target = $region56
      $region55: #{encoder_forward.1} parent=51 // pred_region
        %s1441 = smul.u32 8, %s23
        %p1442 = scmp.lt.s32.totalorder %s22, 1
        %s1443 = scalar_select %p1442, %s22, 1
        %p1444 = scmp.lt.s32.totalorder %s1441, 7
        %s1445 = scalar_select %p1444, %s1441, 7
        %s1446 = smul.addr %s1445, 2
        %s1447 = smul.addr %s1443, 16
        %s1448 = sadd.s32 %s1446, %s1447
        %s1449 = smul.addr %s1448, 8
        %s1450 = scalar_lea.vmem %s2, %s1449
      $region56: #{encoder_forward.1} parent=51 // pred_fallthru
        _
      // Predicated region
      $region57: #{encoder_forward.1} parent=51 // pred_check
        %p1451 = pneg %p134
      $region58: #{encoder_forward.1} parent=51 // pred_check_branch
        %1453 = sbr.rel (%p1451) target = $region60
      $region59: #{encoder_forward.1} parent=51 // pred_region
        %p1454 = scmp.lt.s32.totalorder %s22, 1
        %s1455 = scalar_select %p1454, %s22, 1
        %s1456 = smul.addr %s1455, 2
        %s1457 = smul.addr %s1456, 8
        %s1458 = scalar_lea.vmem %s3, %s1457
      $region60: #{encoder_forward.1} parent=51 // pred_fallthru
        _
      // Predicated region
      $region61: #{encoder_forward.1} parent=51 // pred_check
        %p1459 = pneg %p160
      $region62: #{encoder_forward.1} parent=51 // pred_check_branch
        %1461 = sbr.rel (%p1459) target = $region64
      $region63: #{encoder_forward.1} parent=51 // pred_region
        %p1462 = scmp.lt.s32.totalorder %s22, 1
        %s1463 = scalar_select %p1462, %s22, 1
        %s1464 = smul.addr %s1463, 2
        %s1465 = smul.addr %s1464, 8
        %s1466 = scalar_lea.vmem %s4, %s1465
      $region64: #{encoder_forward.1} parent=51 // pred_fallthru
        _
    $region52: #{encoder_forward.1} parent=5 // pred_fallthru
      _
  $region6: #{encoder_forward.1} parent=0 // loop_footer
    %s15 = sadd.s32 1, %s11
  $region7: #{encoder_forward.1} parent=0 // loop_footer_branch
    %10 = sbr.rel target = $region3
  $region8: #{encoder_forward.1} parent=0 // loop_exit
    _

</llo_original>
